<compile_context>
chip_gen: v6e
topology: v6e:2x2x1
jax: 0.10.0
libtpu: 0.0.40
codegen_flags: <defaults>
</compile_context>

<pallas_src>
import jax
import jax.numpy as jnp
from jax.experimental import pallas as pl
from jax.experimental.pallas import tpu as pltpu

IMG_SHAPE = (1, 28, 28)          # opt_gan.img_shape
IN_DIM = 1 * 28 * 28             # 784
K_PAD = 896                      # 784 padded up to a multiple of 128 (7 * 128)
H1, H2, OUT = 512, 256, 1

MAX_BATCH_TILE = 256             # fills MXU rows on v6e/v7x; fine on v5e too
MIN_BATCH_TILE = 16              # bf16 native (16, 128) sublane packing


def _pick_batch_tile(batch):
    """Largest multiple-of-16 batch tile <= MAX_BATCH_TILE that covers `batch`."""
    b = ((batch + MIN_BATCH_TILE - 1) // MIN_BATCH_TILE) * MIN_BATCH_TILE
    return min(MAX_BATCH_TILE, max(MIN_BATCH_TILE, b))


def _disc_kernel(x_ref, w1_ref, b1_ref, w2_ref, b2_ref, w3t_ref, b3_ref, o_ref):
    """Fused 3-layer MLP: bf16 matmuls with f32 acc, f32 elementwise, sigmoid."""
    x = x_ref[...]                                                    # (TB, 896) bf16

    # Layer 1: (TB, 896) @ (896, 512) on the MXU, f32 accumulation.
    h1 = jnp.dot(x, w1_ref[...], preferred_element_type=jnp.float32)  # (TB, 512) f32
    h1 = h1 + b1_ref[...]
    h1 = jnp.where(h1 > 0, h1, 0.2 * h1)                              # LeakyReLU(0.2), f32

    # Layer 2: cast activation to bf16 only for the MXU feed.
    h2 = jnp.dot(h1.astype(jnp.bfloat16), w2_ref[...],
                 preferred_element_type=jnp.float32)                  # (TB, 256) f32
    h2 = h2 + b2_ref[...]
    h2 = jnp.where(h2 > 0, h2, 0.2 * h2)

    # Layer 3 (256 -> 1): VPU multiply + lane (XLU) reduction instead of an
    # N=1 MXU matmul.  Output lane width is 1 (tiny masked store; negligible).
    h3 = jnp.sum(h2 * w3t_ref[...], axis=-1, keepdims=True) + b3_ref[...]  # (TB, 1) f32

    o_ref[...] = (1.0 / (1.0 + jnp.exp(-h3))).astype(o_ref.dtype)     # Sigmoid (EUP exp)


@jax.jit
def discriminator_forward(img, params):
    """img: (B, 1, 28, 28) float32 -> validity (B, 1) float32."""
    w1, b1, w2, b2, w3, b3 = params
    B = img.shape[0]
    x = img.reshape(B, -1)                                # (B, 784), matches torch view

    tb = _pick_batch_tile(B)
    Bp = ((B + tb - 1) // tb) * tb

    # Pad batch to the tile, pad K 784 -> 896, and cast MXU operands to bf16.
    # (Single fused XLA pad+convert; zero rows/cols are inert in the matmul.)
    x = jnp.pad(x, ((0, Bp - B), (0, K_PAD - IN_DIM))).astype(jnp.bfloat16)
    w1p = jnp.pad(w1, ((0, K_PAD - IN_DIM), (0, 0))).astype(jnp.bfloat16)
    w2b = w2.astype(jnp.bfloat16)
    w3t = w3.reshape(1, H2)                               # (1, 256) f32, lane-dense

    grid = (Bp // tb,)

    out = pl.pallas_call(
        _disc_kernel,
        out_shape=jax.ShapeDtypeStruct((Bp, OUT), jnp.float32),
        grid_spec=pltpu.PrefetchScalarGridSpec(
            num_scalar_prefetch=0,
            grid=grid,
            in_specs=[
                pl.BlockSpec((tb, K_PAD), lambda i: (i, 0)),   # x tile (bf16)
                pl.BlockSpec((K_PAD, H1), lambda i: (0, 0)),   # w1 (bf16, VMEM-resident)
                pl.BlockSpec((1, H1), lambda i: (0, 0)),       # b1 (f32)
                pl.BlockSpec((H1, H2), lambda i: (0, 0)),      # w2 (bf16, VMEM-resident)
                pl.BlockSpec((1, H2), lambda i: (0, 0)),       # b2 (f32)
                pl.BlockSpec((1, H2), lambda i: (0, 0)),       # w3^T (f32)
                pl.BlockSpec((1, OUT), lambda i: (0, 0)),      # b3 (f32)
            ],
            out_specs=pl.BlockSpec((tb, OUT), lambda i: (i, 0)),
        ),
        compiler_params=pltpu.CompilerParams(
            dimension_semantics=("parallel",),   # shard batch tiles across cores
        ),
    )(x, w1p, b1, w2b, b2, w3t, b3)

    return out[:B]


def init_params(key):
    """Deterministic synthetic init (PyTorch-Linear-like uniform bounds), f32."""
    k1, k2, k3, k4, k5, k6 = jax.random.split(key, 6)

    def lin(kw, kb, fan_in, fan_out):
        bound = 1.0 / jnp.sqrt(fan_in)
        w = jax.random.uniform(kw, (fan_in, fan_out), jnp.float32, -bound, bound)
        b = jax.random.uniform(kb, (1, fan_out), jnp.float32, -bound, bound)
        return w, b

    w1, b1 = lin(k1, k2, IN_DIM, H1)
    w2, b2 = lin(k3, k4, H1, H2)
    w3, b3 = lin(k5, k6, H2, OUT)
    return (w1, b1, w2, b2, w3, b3)


def _reference_forward_bf16(img, params):
    """Pure-JAX reference mirroring the kernel's bf16-matmul / f32-acc math."""
    w1, b1, w2, b2, w3, b3 = params
    x = img.reshape(img.shape[0], -1)
    h = jnp.dot(x.astype(jnp.bfloat16), w1.astype(jnp.bfloat16),
                preferred_element_type=jnp.float32) + b1
    h = jnp.where(h > 0, h, 0.2 * h)
    h = jnp.dot(h.astype(jnp.bfloat16), w2.astype(jnp.bfloat16),
                preferred_element_type=jnp.float32) + b2
    h = jnp.where(h > 0, h, 0.2 * h)
    h = jnp.sum(h * w3.reshape(1, H2), axis=-1, keepdims=True) + b3
    return 1.0 / (1.0 + jnp.exp(-h))


def _reference_forward_f32(img, params):
    """Pure-f32 reference (matches the original PyTorch module semantics)."""
    w1, b1, w2, b2, w3, b3 = params
    x = img.reshape(img.shape[0], -1)
    h = x @ w1 + b1
    h = jnp.where(h > 0, h, 0.2 * h)
    h = h @ w2 + b2
    h = jnp.where(h > 0, h, 0.2 * h)
    h = h @ w3 + b3
    return jax.nn.sigmoid(h)


if __name__ == "__main__":
    key = jax.random.PRNGKey(0)
    k_img, k_par = jax.random.split(key)

    batch = 2
    img = jax.random.normal(k_img, (batch, *IMG_SHAPE), dtype=jnp.float32)
    params = init_params(k_par)

    validity = discriminator_forward(img, params)
    jax.block_until_ready(validity)

    assert validity.shape == (batch, OUT), validity.shape

    ref_bf16 = _reference_forward_bf16(img, params)
    assert jnp.allclose(validity, ref_bf16, atol=1e-4, rtol=1e-4), (
        "mismatch vs bf16-mirrored reference"
    )

    ref_f32 = _reference_forward_f32(img, params)
    assert jnp.allclose(validity, ref_f32, atol=3e-2, rtol=3e-2), (
        "mismatch vs f32 reference"
    )

    print("KERNEL_OK")
</pallas_src>

<mosaic_0001>
module attributes {stable_mosaic.version = 11 : i64} {
  func.func @_disc_kernel(%arg0: i32, %arg1: memref<16x896xbf16, #tpu.memory_space<vmem>>, %arg2: memref<896x512xbf16, #tpu.memory_space<vmem>>, %arg3: memref<1x512xf32, #tpu.memory_space<vmem>>, %arg4: memref<512x256xbf16, #tpu.memory_space<vmem>>, %arg5: memref<1x256xf32, #tpu.memory_space<vmem>>, %arg6: memref<1x256xf32, #tpu.memory_space<vmem>>, %arg7: memref<1x1xf32, #tpu.memory_space<vmem>>, %arg8: memref<16x1xf32, #tpu.memory_space<vmem>>) attributes {dimension_semantics = [#tpu.dimension_semantics<parallel>], iteration_bounds = array<i64: 1>, scalar_prefetch = 0 : i64, scratch_operands = 0 : i64, tpu.core_type = #tpu.core_type<tc>, window_params = [{transform_indices = @transform_0, window_bounds = array<i64: 16, 896>}, {pipeline_mode = #tpu.pipeline_mode<synchronous>, transform_indices = @transform_1, window_bounds = array<i64: 896, 512>}, {pipeline_mode = #tpu.pipeline_mode<synchronous>, transform_indices = @transform_2, window_bounds = array<i64: 1, 512>}, {pipeline_mode = #tpu.pipeline_mode<synchronous>, transform_indices = @transform_3, window_bounds = array<i64: 512, 256>}, {pipeline_mode = #tpu.pipeline_mode<synchronous>, transform_indices = @transform_4, window_bounds = array<i64: 1, 256>}, {pipeline_mode = #tpu.pipeline_mode<synchronous>, transform_indices = @transform_5, window_bounds = array<i64: 1, 256>}, {pipeline_mode = #tpu.pipeline_mode<synchronous>, transform_indices = @transform_6, window_bounds = array<i64: 1, 1>}, {transform_indices = @transform_7, window_bounds = array<i64: 16, 1>}]} {
    %c0 = arith.constant 0 : index
    %c0_0 = arith.constant 0 : index
    %0 = vector.load %arg1[%c0, %c0_0] : memref<16x896xbf16, #tpu.memory_space<vmem>>, vector<16x896xbf16>
    %c0_1 = arith.constant 0 : index
    %c0_2 = arith.constant 0 : index
    %1 = vector.load %arg2[%c0_1, %c0_2] : memref<896x512xbf16, #tpu.memory_space<vmem>>, vector<896x512xbf16>
    %cst = arith.constant dense<0.000000e+00> : vector<16x512xf32>
    %2 = tpu.matmul %0, %1, %cst {dimension_numbers = #tpu.dot_dimension_numbers<[1], [0], [0], [1], [0, 0, 1, 1], [], []>} : vector<16x896xbf16>, vector<896x512xbf16>, vector<16x512xf32> -> vector<16x512xf32>
    %c0_3 = arith.constant 0 : index
    %c0_4 = arith.constant 0 : index
    %3 = vector.load %arg3[%c0_3, %c0_4] : memref<1x512xf32, #tpu.memory_space<vmem>>, vector<1x512xf32>
    %4 = vector.broadcast %3 : vector<1x512xf32> to vector<16x512xf32>
    %5 = arith.addf %2, %4 : vector<16x512xf32>
    %cst_5 = arith.constant 0.000000e+00 : f32
    %6 = vector.broadcast %cst_5 : f32 to vector<16x512xf32>
    %7 = arith.cmpf ogt, %5, %6 : vector<16x512xf32>
    %cst_6 = arith.constant 2.000000e-01 : f32
    %8 = vector.broadcast %cst_6 : f32 to vector<16x512xf32>
    %9 = arith.mulf %8, %5 : vector<16x512xf32>
    %10 = arith.select %7, %5, %9 : vector<16x512xi1>, vector<16x512xf32>
    %11 = arith.truncf %10 : vector<16x512xf32> to vector<16x512xbf16>
    %c0_7 = arith.constant 0 : index
    %c0_8 = arith.constant 0 : index
    %12 = vector.load %arg4[%c0_7, %c0_8] : memref<512x256xbf16, #tpu.memory_space<vmem>>, vector<512x256xbf16>
    %cst_9 = arith.constant dense<0.000000e+00> : vector<16x256xf32>
    %13 = tpu.matmul %11, %12, %cst_9 {dimension_numbers = #tpu.dot_dimension_numbers<[1], [0], [0], [1], [0, 0, 1, 1], [], []>} : vector<16x512xbf16>, vector<512x256xbf16>, vector<16x256xf32> -> vector<16x256xf32>
    %c0_10 = arith.constant 0 : index
    %c0_11 = arith.constant 0 : index
    %14 = vector.load %arg5[%c0_10, %c0_11] : memref<1x256xf32, #tpu.memory_space<vmem>>, vector<1x256xf32>
    %15 = vector.broadcast %14 : vector<1x256xf32> to vector<16x256xf32>
    %16 = arith.addf %13, %15 : vector<16x256xf32>
    %cst_12 = arith.constant 0.000000e+00 : f32
    %17 = vector.broadcast %cst_12 : f32 to vector<16x256xf32>
    %18 = arith.cmpf ogt, %16, %17 : vector<16x256xf32>
    %cst_13 = arith.constant 2.000000e-01 : f32
    %19 = vector.broadcast %cst_13 : f32 to vector<16x256xf32>
    %20 = arith.mulf %19, %16 : vector<16x256xf32>
    %21 = arith.select %18, %16, %20 : vector<16x256xi1>, vector<16x256xf32>
    %c0_14 = arith.constant 0 : index
    %c0_15 = arith.constant 0 : index
    %22 = vector.load %arg6[%c0_14, %c0_15] : memref<1x256xf32, #tpu.memory_space<vmem>>, vector<1x256xf32>
    %23 = vector.broadcast %22 : vector<1x256xf32> to vector<16x256xf32>
    %24 = arith.mulf %21, %23 : vector<16x256xf32>
    %cst_16 = arith.constant dense<0.000000e+00> : vector<16xf32>
    %25 = vector.multi_reduction <add>, %24, %cst_16 [1] : vector<16x256xf32> to vector<16xf32>
    %26 = vector.shape_cast %25 : vector<16xf32> to vector<16x1xf32>
    %c0_17 = arith.constant 0 : index
    %c0_18 = arith.constant 0 : index
    %27 = vector.load %arg7[%c0_17, %c0_18] : memref<1x1xf32, #tpu.memory_space<vmem>>, vector<1x1xf32>
    %28 = vector.broadcast %27 : vector<1x1xf32> to vector<16x1xf32>
    %29 = arith.addf %26, %28 : vector<16x1xf32>
    %cst_19 = arith.constant 0.000000e+00 : f32
    %30 = vector.broadcast %cst_19 : f32 to vector<16x1xf32>
    %31 = arith.subf %30, %29 : vector<16x1xf32>
    %32 = math.exp %31 : vector<16x1xf32>
    %cst_20 = arith.constant 1.000000e+00 : f32
    %33 = vector.broadcast %cst_20 : f32 to vector<16x1xf32>
    %34 = arith.addf %33, %32 : vector<16x1xf32>
    %cst_21 = arith.constant 1.000000e+00 : f32
    %35 = vector.broadcast %cst_21 : f32 to vector<16x1xf32>
    %36 = arith.divf %35, %34 : vector<16x1xf32>
    %c0_22 = arith.constant 0 : index
    %c0_23 = arith.constant 0 : index
    %37 = vector.load %arg8[%c0_22, %c0_23] : memref<16x1xf32, #tpu.memory_space<vmem>>, vector<16x1xf32>
    tpu.vector_store %arg8[%c0_22, %c0_23], %36 {strides = array<i32>} : memref<16x1xf32, #tpu.memory_space<vmem>>, vector<16x1xf32>,
    return
  }
  func.func @transform_0(%arg0: i32) -> (i32, i32) {
    %c0_i32 = arith.constant 0 : i32
    %c0_i32_0 = arith.constant 0 : i32
    return %arg0, %c0_i32 : i32, i32
  }
  func.func @transform_1(%arg0: i32) -> (i32, i32) {
    %c0_i32 = arith.constant 0 : i32
    %c0_i32_0 = arith.constant 0 : i32
    %c0_i32_1 = arith.constant 0 : i32
    return %c0_i32, %c0_i32_0 : i32, i32
  }
  func.func @transform_2(%arg0: i32) -> (i32, i32) {
    %c0_i32 = arith.constant 0 : i32
    %c0_i32_0 = arith.constant 0 : i32
    %c0_i32_1 = arith.constant 0 : i32
    return %c0_i32, %c0_i32_0 : i32, i32
  }
  func.func @transform_3(%arg0: i32) -> (i32, i32) {
    %c0_i32 = arith.constant 0 : i32
    %c0_i32_0 = arith.constant 0 : i32
    %c0_i32_1 = arith.constant 0 : i32
    return %c0_i32, %c0_i32_0 : i32, i32
  }
  func.func @transform_4(%arg0: i32) -> (i32, i32) {
    %c0_i32 = arith.constant 0 : i32
    %c0_i32_0 = arith.constant 0 : i32
    %c0_i32_1 = arith.constant 0 : i32
    return %c0_i32, %c0_i32_0 : i32, i32
  }
  func.func @transform_5(%arg0: i32) -> (i32, i32) {
    %c0_i32 = arith.constant 0 : i32
    %c0_i32_0 = arith.constant 0 : i32
    %c0_i32_1 = arith.constant 0 : i32
    return %c0_i32, %c0_i32_0 : i32, i32
  }
  func.func @transform_6(%arg0: i32) -> (i32, i32) {
    %c0_i32 = arith.constant 0 : i32
    %c0_i32_0 = arith.constant 0 : i32
    %c0_i32_1 = arith.constant 0 : i32
    return %c0_i32, %c0_i32_0 : i32, i32
  }
  func.func @transform_7(%arg0: i32) -> (i32, i32) {
    %c0_i32 = arith.constant 0 : i32
    %c0_i32_0 = arith.constant 0 : i32
    return %arg0, %c0_i32 : i32, i32
  }
}

</mosaic_0001>

<llo_original>
// kernel: discriminator_forward.1
$region0: #{discriminator_forward.1}
  #allocation0 [shape = 'u32[]', space=smem, size = 0x4, offset = 0x4, fixed_abs, tag = 'smem constant byte address 0x4 - core index']
  #allocation1 [shape = 'u32[144,128]{1,0:T(1,128)}', space=vmem, size = 0x12000, scoped, tag = 'internal scratch']
  #allocation2 [shape = 'f32[1,1]{1,0:T(1,128)S(1)}', space=vmem, size = 0x200, scoped, tag = 'scoped memory for discriminator_forward.1']
  %s0 = inlined_call_operand.vmem [shape: bf16[16,896], index: 0, kind: input, shape index: {}]
  %s1 = inlined_call_operand.vmem [shape: bf16[896,512], index: 1, kind: input, shape index: {}]
  %s2 = inlined_call_operand.vmem [shape: f32[1,512], index: 2, kind: input, shape index: {}]
  %s3 = inlined_call_operand.vmem [shape: bf16[512,256], index: 3, kind: input, shape index: {}]
  %s4 = inlined_call_operand.vmem [shape: f32[1,256], index: 4, kind: input, shape index: {}]
  %s5 = inlined_call_operand.vmem [shape: f32[1,256], index: 5, kind: input, shape index: {}]
  %s6 = inlined_call_operand.<no memory space> [shape: f32[1,1], index: 6, kind: input, shape index: {}]
  %s7 = inlined_call_operand.vmem [shape: f32[16,1], index: 7, kind: output, shape index: {}]
  %s8 = sld [smem:[#allocation0]]
  $region38: #{discriminator_forward.1} parent=0
    _
  %s10 = ssub.s32 1, %s8
  %s11 = scalar_select 0, %s10, %s8
  %v12 = vstv %s6
  %13 = vst [vmem:[#allocation2] sm:$0x1] %v12
  // Predicated region
  $region2: #{discriminator_forward.1} parent=0 // pred_check
    _
  $region3: #{discriminator_forward.1} parent=0 // pred_check_branch
    %15 = sbr.rel (0) target = $region5
  $region4: #{discriminator_forward.1} parent=0 // pred_region
    _
  $region5: #{discriminator_forward.1} parent=0 // pred_fallthru
    _
  // Predicated region
  $region6: #{discriminator_forward.1} parent=0 // pred_check
    _
  $region7: #{discriminator_forward.1} parent=0 // pred_check_branch
    %17 = sbr.rel (0) target = $region9
  $region8: #{discriminator_forward.1} parent=0 // pred_region
    _
  $region9: #{discriminator_forward.1} parent=0 // pred_fallthru
    _
  // Predicated region
  $region10: #{discriminator_forward.1} parent=0 // pred_check
    _
  $region11: #{discriminator_forward.1} parent=0 // pred_check_branch
    %19 = sbr.rel (0) target = $region13
  $region12: #{discriminator_forward.1} parent=0 // pred_region
    _
  $region13: #{discriminator_forward.1} parent=0 // pred_fallthru
    _
  // Predicated region
  $region14: #{discriminator_forward.1} parent=0 // pred_check
    _
  $region15: #{discriminator_forward.1} parent=0 // pred_check_branch
    %21 = sbr.rel (0) target = $region17
  $region16: #{discriminator_forward.1} parent=0 // pred_region
    _
  $region17: #{discriminator_forward.1} parent=0 // pred_fallthru
    _
  // Predicated region
  $region18: #{discriminator_forward.1} parent=0 // pred_check
    _
  $region19: #{discriminator_forward.1} parent=0 // pred_check_branch
    %23 = sbr.rel (0) target = $region21
  $region20: #{discriminator_forward.1} parent=0 // pred_region
    _
  $region21: #{discriminator_forward.1} parent=0 // pred_fallthru
    _
  // Predicated region
  $region22: #{discriminator_forward.1} parent=0 // pred_check
    _
  $region23: #{discriminator_forward.1} parent=0 // pred_check_branch
    %25 = sbr.rel (0) target = $region25
  $region24: #{discriminator_forward.1} parent=0 // pred_region
    _
  $region25: #{discriminator_forward.1} parent=0 // pred_fallthru
    _
  // Predicated region
  $region26: #{discriminator_forward.1} parent=0 // pred_check
    _
  $region27: #{discriminator_forward.1} parent=0 // pred_check_branch
    %27 = sbr.rel (0) target = $region29
  $region28: #{discriminator_forward.1} parent=0 // pred_region
    _
  $region29: #{discriminator_forward.1} parent=0 // pred_fallthru
    _
  %v29 = vld [vmem:[%s0] sm:$0xff]
  %v30 = vld [vmem:[%s0 + $0x8] sm:$0xff]
  %v31 = vld [vmem:[%s0 + $0x10] sm:$0xff]
  %v32 = vld [vmem:[%s0 + $0x18] sm:$0xf]
  %v33 = vld [vmem:[%s0 + $0x1c] sm:$0xff]
  %v34 = vld [vmem:[%s0 + $0x24] sm:$0xff]
  %v35 = vld [vmem:[%s0 + $0x2c] sm:$0xff]
  %v36 = vld [vmem:[%s0 + $0x34] sm:$0xf]
  %v37 = vld [vmem:[%s1] sm:$0xff]
  %v38 = vld [vmem:[%s1 + $0x8] sm:$0xff]
  %v39 = vld [vmem:[%s1 + $0x10] sm:$0xff]
  %v40 = vld [vmem:[%s1 + $0x18] sm:$0xff]
  %v41 = vld [vmem:[%s1 + $0x20] sm:$0xff]
  %v42 = vld [vmem:[%s1 + $0x28] sm:$0xff]
  %v43 = vld [vmem:[%s1 + $0x30] sm:$0xff]
  %v44 = vld [vmem:[%s1 + $0x38] sm:$0xff]
  %v45 = vld [vmem:[%s1 + $0x40] sm:$0xff]
  %v46 = vld [vmem:[%s1 + $0x48] sm:$0xff]
  %v47 = vld [vmem:[%s1 + $0x50] sm:$0xff]
  %v48 = vld [vmem:[%s1 + $0x58] sm:$0xff]
  %v49 = vld [vmem:[%s1 + $0x60] sm:$0xff]
  %v50 = vld [vmem:[%s1 + $0x68] sm:$0xff]
  %v51 = vld [vmem:[%s1 + $0x70] sm:$0xff]
  %v52 = vld [vmem:[%s1 + $0x78] sm:$0xff]
  %v53 = vld [vmem:[%s1 + $0x80] sm:$0xff]
  %v54 = vld [vmem:[%s1 + $0x88] sm:$0xff]
  %v55 = vld [vmem:[%s1 + $0x90] sm:$0xff]
  %v56 = vld [vmem:[%s1 + $0x98] sm:$0xff]
  %v57 = vld [vmem:[%s1 + $0xa0] sm:$0xff]
  %v58 = vld [vmem:[%s1 + $0xa8] sm:$0xff]
  %v59 = vld [vmem:[%s1 + $0xb0] sm:$0xff]
  %v60 = vld [vmem:[%s1 + $0xb8] sm:$0xff]
  %v61 = vld [vmem:[%s1 + $0xc0] sm:$0xff]
  %v62 = vld [vmem:[%s1 + $0xc8] sm:$0xff]
  %v63 = vld [vmem:[%s1 + $0xd0] sm:$0xff]
  %v64 = vld [vmem:[%s1 + $0xd8] sm:$0xff]
  %v65 = vld [vmem:[%s1 + $0xe0] sm:$0xff]
  %v66 = vld [vmem:[%s1 + $0xe8] sm:$0xff]
  %v67 = vld [vmem:[%s1 + $0xf0] sm:$0xff]
  %v68 = vld [vmem:[%s1 + $0xf8] sm:$0xff]
  %v69 = vld [vmem:[%s1 + $0x100] sm:$0xff]
  %v70 = vld [vmem:[%s1 + $0x108] sm:$0xff]
  %v71 = vld [vmem:[%s1 + $0x110] sm:$0xff]
  %v72 = vld [vmem:[%s1 + $0x118] sm:$0xff]
  %v73 = vld [vmem:[%s1 + $0x120] sm:$0xff]
  %v74 = vld [vmem:[%s1 + $0x128] sm:$0xff]
  %v75 = vld [vmem:[%s1 + $0x130] sm:$0xff]
  %v76 = vld [vmem:[%s1 + $0x138] sm:$0xff]
  %v77 = vld [vmem:[%s1 + $0x140] sm:$0xff]
  %v78 = vld [vmem:[%s1 + $0x148] sm:$0xff]
  %v79 = vld [vmem:[%s1 + $0x150] sm:$0xff]
  %v80 = vld [vmem:[%s1 + $0x158] sm:$0xff]
  %v81 = vld [vmem:[%s1 + $0x160] sm:$0xff]
  %v82 = vld [vmem:[%s1 + $0x168] sm:$0xff]
  %v83 = vld [vmem:[%s1 + $0x170] sm:$0xff]
  %v84 = vld [vmem:[%s1 + $0x178] sm:$0xff]
  %v85 = vld [vmem:[%s1 + $0x180] sm:$0xff]
  %v86 = vld [vmem:[%s1 + $0x188] sm:$0xff]
  %v87 = vld [vmem:[%s1 + $0x190] sm:$0xff]
  %v88 = vld [vmem:[%s1 + $0x198] sm:$0xff]
  %v89 = vld [vmem:[%s1 + $0x1a0] sm:$0xff]
  %v90 = vld [vmem:[%s1 + $0x1a8] sm:$0xff]
  %v91 = vld [vmem:[%s1 + $0x1b0] sm:$0xff]
  %v92 = vld [vmem:[%s1 + $0x1b8] sm:$0xff]
  %v93 = vld [vmem:[%s1 + $0x1c0] sm:$0xff]
  %v94 = vld [vmem:[%s1 + $0x1c8] sm:$0xff]
  %v95 = vld [vmem:[%s1 + $0x1d0] sm:$0xff]
  %v96 = vld [vmem:[%s1 + $0x1d8] sm:$0xff]
  %v97 = vld [vmem:[%s1 + $0x1e0] sm:$0xff]
  %v98 = vld [vmem:[%s1 + $0x1e8] sm:$0xff]
  %v99 = vld [vmem:[%s1 + $0x1f0] sm:$0xff]
  %v100 = vld [vmem:[%s1 + $0x1f8] sm:$0xff]
  %v101 = vld [vmem:[%s1 + $0x200] sm:$0xff]
  %v102 = vld [vmem:[%s1 + $0x208] sm:$0xff]
  %v103 = vld [vmem:[%s1 + $0x210] sm:$0xff]
  %v104 = vld [vmem:[%s1 + $0x218] sm:$0xff]
  %v105 = vld [vmem:[%s1 + $0x220] sm:$0xff]
  %v106 = vld [vmem:[%s1 + $0x228] sm:$0xff]
  %v107 = vld [vmem:[%s1 + $0x230] sm:$0xff]
  %v108 = vld [vmem:[%s1 + $0x238] sm:$0xff]
  %v109 = vld [vmem:[%s1 + $0x240] sm:$0xff]
  %v110 = vld [vmem:[%s1 + $0x248] sm:$0xff]
  %v111 = vld [vmem:[%s1 + $0x250] sm:$0xff]
  %v112 = vld [vmem:[%s1 + $0x258] sm:$0xff]
  %v113 = vld [vmem:[%s1 + $0x260] sm:$0xff]
  %v114 = vld [vmem:[%s1 + $0x268] sm:$0xff]
  %v115 = vld [vmem:[%s1 + $0x270] sm:$0xff]
  %v116 = vld [vmem:[%s1 + $0x278] sm:$0xff]
  %v117 = vld [vmem:[%s1 + $0x280] sm:$0xff]
  %v118 = vld [vmem:[%s1 + $0x288] sm:$0xff]
  %v119 = vld [vmem:[%s1 + $0x290] sm:$0xff]
  %v120 = vld [vmem:[%s1 + $0x298] sm:$0xff]
  %v121 = vld [vmem:[%s1 + $0x2a0] sm:$0xff]
  %v122 = vld [vmem:[%s1 + $0x2a8] sm:$0xff]
  %v123 = vld [vmem:[%s1 + $0x2b0] sm:$0xff]
  %v124 = vld [vmem:[%s1 + $0x2b8] sm:$0xff]
  %v125 = vld [vmem:[%s1 + $0x2c0] sm:$0xff]
  %v126 = vld [vmem:[%s1 + $0x2c8] sm:$0xff]
  %v127 = vld [vmem:[%s1 + $0x2d0] sm:$0xff]
  %v128 = vld [vmem:[%s1 + $0x2d8] sm:$0xff]
  %v129 = vld [vmem:[%s1 + $0x2e0] sm:$0xff]
  %v130 = vld [vmem:[%s1 + $0x2e8] sm:$0xff]
  %v131 = vld [vmem:[%s1 + $0x2f0] sm:$0xff]
  %v132 = vld [vmem:[%s1 + $0x2f8] sm:$0xff]
  %v133 = vld [vmem:[%s1 + $0x300] sm:$0xff]
  %v134 = vld [vmem:[%s1 + $0x308] sm:$0xff]
  %v135 = vld [vmem:[%s1 + $0x310] sm:$0xff]
  %v136 = vld [vmem:[%s1 + $0x318] sm:$0xff]
  %v137 = vld [vmem:[%s1 + $0x320] sm:$0xff]
  %v138 = vld [vmem:[%s1 + $0x328] sm:$0xff]
  %v139 = vld [vmem:[%s1 + $0x330] sm:$0xff]
  %v140 = vld [vmem:[%s1 + $0x338] sm:$0xff]
  %v141 = vld [vmem:[%s1 + $0x340] sm:$0xff]
  %v142 = vld [vmem:[%s1 + $0x348] sm:$0xff]
  %v143 = vld [vmem:[%s1 + $0x350] sm:$0xff]
  %v144 = vld [vmem:[%s1 + $0x358] sm:$0xff]
  %v145 = vld [vmem:[%s1 + $0x360] sm:$0xff]
  %v146 = vld [vmem:[%s1 + $0x368] sm:$0xff]
  %v147 = vld [vmem:[%s1 + $0x370] sm:$0xff]
  %v148 = vld [vmem:[%s1 + $0x378] sm:$0xff]
  %v149 = vld [vmem:[%s1 + $0x380] sm:$0xff]
  %v150 = vld [vmem:[%s1 + $0x388] sm:$0xff]
  %v151 = vld [vmem:[%s1 + $0x390] sm:$0xff]
  %v152 = vld [vmem:[%s1 + $0x398] sm:$0xff]
  %v153 = vld [vmem:[%s1 + $0x3a0] sm:$0xff]
  %v154 = vld [vmem:[%s1 + $0x3a8] sm:$0xff]
  %v155 = vld [vmem:[%s1 + $0x3b0] sm:$0xff]
  %v156 = vld [vmem:[%s1 + $0x3b8] sm:$0xff]
  %v157 = vld [vmem:[%s1 + $0x3c0] sm:$0xff]
  %v158 = vld [vmem:[%s1 + $0x3c8] sm:$0xff]
  %v159 = vld [vmem:[%s1 + $0x3d0] sm:$0xff]
  %v160 = vld [vmem:[%s1 + $0x3d8] sm:$0xff]
  %v161 = vld [vmem:[%s1 + $0x3e0] sm:$0xff]
  %v162 = vld [vmem:[%s1 + $0x3e8] sm:$0xff]
  %v163 = vld [vmem:[%s1 + $0x3f0] sm:$0xff]
  %v164 = vld [vmem:[%s1 + $0x3f8] sm:$0xff]
  %v165 = vld [vmem:[%s1 + $0x400] sm:$0xff]
  %v166 = vld [vmem:[%s1 + $0x408] sm:$0xff]
  %v167 = vld [vmem:[%s1 + $0x410] sm:$0xff]
  %v168 = vld [vmem:[%s1 + $0x418] sm:$0xff]
  %v169 = vld [vmem:[%s1 + $0x420] sm:$0xff]
  %v170 = vld [vmem:[%s1 + $0x428] sm:$0xff]
  %v171 = vld [vmem:[%s1 + $0x430] sm:$0xff]
  %v172 = vld [vmem:[%s1 + $0x438] sm:$0xff]
  %v173 = vld [vmem:[%s1 + $0x440] sm:$0xff]
  %v174 = vld [vmem:[%s1 + $0x448] sm:$0xff]
  %v175 = vld [vmem:[%s1 + $0x450] sm:$0xff]
  %v176 = vld [vmem:[%s1 + $0x458] sm:$0xff]
  %v177 = vld [vmem:[%s1 + $0x460] sm:$0xff]
  %v178 = vld [vmem:[%s1 + $0x468] sm:$0xff]
  %v179 = vld [vmem:[%s1 + $0x470] sm:$0xff]
  %v180 = vld [vmem:[%s1 + $0x478] sm:$0xff]
  %v181 = vld [vmem:[%s1 + $0x480] sm:$0xff]
  %v182 = vld [vmem:[%s1 + $0x488] sm:$0xff]
  %v183 = vld [vmem:[%s1 + $0x490] sm:$0xff]
  %v184 = vld [vmem:[%s1 + $0x498] sm:$0xff]
  %v185 = vld [vmem:[%s1 + $0x4a0] sm:$0xff]
  %v186 = vld [vmem:[%s1 + $0x4a8] sm:$0xff]
  %v187 = vld [vmem:[%s1 + $0x4b0] sm:$0xff]
  %v188 = vld [vmem:[%s1 + $0x4b8] sm:$0xff]
  %v189 = vld [vmem:[%s1 + $0x4c0] sm:$0xff]
  %v190 = vld [vmem:[%s1 + $0x4c8] sm:$0xff]
  %v191 = vld [vmem:[%s1 + $0x4d0] sm:$0xff]
  %v192 = vld [vmem:[%s1 + $0x4d8] sm:$0xff]
  %v193 = vld [vmem:[%s1 + $0x4e0] sm:$0xff]
  %v194 = vld [vmem:[%s1 + $0x4e8] sm:$0xff]
  %v195 = vld [vmem:[%s1 + $0x4f0] sm:$0xff]
  %v196 = vld [vmem:[%s1 + $0x4f8] sm:$0xff]
  %v197 = vld [vmem:[%s1 + $0x500] sm:$0xff]
  %v198 = vld [vmem:[%s1 + $0x508] sm:$0xff]
  %v199 = vld [vmem:[%s1 + $0x510] sm:$0xff]
  %v200 = vld [vmem:[%s1 + $0x518] sm:$0xff]
  %v201 = vld [vmem:[%s1 + $0x520] sm:$0xff]
  %v202 = vld [vmem:[%s1 + $0x528] sm:$0xff]
  %v203 = vld [vmem:[%s1 + $0x530] sm:$0xff]
  %v204 = vld [vmem:[%s1 + $0x538] sm:$0xff]
  %v205 = vld [vmem:[%s1 + $0x540] sm:$0xff]
  %v206 = vld [vmem:[%s1 + $0x548] sm:$0xff]
  %v207 = vld [vmem:[%s1 + $0x550] sm:$0xff]
  %v208 = vld [vmem:[%s1 + $0x558] sm:$0xff]
  %v209 = vld [vmem:[%s1 + $0x560] sm:$0xff]
  %v210 = vld [vmem:[%s1 + $0x568] sm:$0xff]
  %v211 = vld [vmem:[%s1 + $0x570] sm:$0xff]
  %v212 = vld [vmem:[%s1 + $0x578] sm:$0xff]
  %v213 = vld [vmem:[%s1 + $0x580] sm:$0xff]
  %v214 = vld [vmem:[%s1 + $0x588] sm:$0xff]
  %v215 = vld [vmem:[%s1 + $0x590] sm:$0xff]
  %v216 = vld [vmem:[%s1 + $0x598] sm:$0xff]
  %v217 = vld [vmem:[%s1 + $0x5a0] sm:$0xff]
  %v218 = vld [vmem:[%s1 + $0x5a8] sm:$0xff]
  %v219 = vld [vmem:[%s1 + $0x5b0] sm:$0xff]
  %v220 = vld [vmem:[%s1 + $0x5b8] sm:$0xff]
  %v221 = vld [vmem:[%s1 + $0x5c0] sm:$0xff]
  %v222 = vld [vmem:[%s1 + $0x5c8] sm:$0xff]
  %v223 = vld [vmem:[%s1 + $0x5d0] sm:$0xff]
  %v224 = vld [vmem:[%s1 + $0x5d8] sm:$0xff]
  %v225 = vld [vmem:[%s1 + $0x5e0] sm:$0xff]
  %v226 = vld [vmem:[%s1 + $0x5e8] sm:$0xff]
  %v227 = vld [vmem:[%s1 + $0x5f0] sm:$0xff]
  %v228 = vld [vmem:[%s1 + $0x5f8] sm:$0xff]
  %v229 = vld [vmem:[%s1 + $0x600] sm:$0xff]
  %v230 = vld [vmem:[%s1 + $0x608] sm:$0xff]
  %v231 = vld [vmem:[%s1 + $0x610] sm:$0xff]
  %v232 = vld [vmem:[%s1 + $0x618] sm:$0xff]
  %v233 = vld [vmem:[%s1 + $0x620] sm:$0xff]
  %v234 = vld [vmem:[%s1 + $0x628] sm:$0xff]
  %v235 = vld [vmem:[%s1 + $0x630] sm:$0xff]
  %v236 = vld [vmem:[%s1 + $0x638] sm:$0xff]
  %v237 = vld [vmem:[%s1 + $0x640] sm:$0xff]
  %v238 = vld [vmem:[%s1 + $0x648] sm:$0xff]
  %v239 = vld [vmem:[%s1 + $0x650] sm:$0xff]
  %v240 = vld [vmem:[%s1 + $0x658] sm:$0xff]
  %v241 = vld [vmem:[%s1 + $0x660] sm:$0xff]
  %v242 = vld [vmem:[%s1 + $0x668] sm:$0xff]
  %v243 = vld [vmem:[%s1 + $0x670] sm:$0xff]
  %v244 = vld [vmem:[%s1 + $0x678] sm:$0xff]
  %v245 = vld [vmem:[%s1 + $0x680] sm:$0xff]
  %v246 = vld [vmem:[%s1 + $0x688] sm:$0xff]
  %v247 = vld [vmem:[%s1 + $0x690] sm:$0xff]
  %v248 = vld [vmem:[%s1 + $0x698] sm:$0xff]
  %v249 = vld [vmem:[%s1 + $0x6a0] sm:$0xff]
  %v250 = vld [vmem:[%s1 + $0x6a8] sm:$0xff]
  %v251 = vld [vmem:[%s1 + $0x6b0] sm:$0xff]
  %v252 = vld [vmem:[%s1 + $0x6b8] sm:$0xff]
  %v253 = vld [vmem:[%s1 + $0x6c0] sm:$0xff]
  %v254 = vld [vmem:[%s1 + $0x6c8] sm:$0xff]
  %v255 = vld [vmem:[%s1 + $0x6d0] sm:$0xff]
  %v256 = vld [vmem:[%s1 + $0x6d8] sm:$0xff]
  %v257 = vld [vmem:[%s1 + $0x6e0] sm:$0xff]
  %v258 = vld [vmem:[%s1 + $0x6e8] sm:$0xff]
  %v259 = vld [vmem:[%s1 + $0x6f0] sm:$0xff]
  %v260 = vld [vmem:[%s1 + $0x6f8] sm:$0xff]
  %v261 = vld [vmem:[%s2] sm:$0xf]
  %v263 = vlaneseq
  %v264 = vshrl.u32 %v263, 7
  %v265 = vsub.s32 0, %v264
  %v266 = vrot.slane %v261, %v265
  %v267 = vlaneseq
  %v268 = vshrl.u32 %v267, 7
  %v269 = vsub.s32 1, %v268
  %v270 = vrot.slane %v261, %v269
  %v271 = vlaneseq
  %v272 = vshrl.u32 %v271, 7
  %v273 = vsub.s32 2, %v272
  %v274 = vrot.slane %v261, %v273
  %v275 = vlaneseq
  %v276 = vshrl.u32 %v275, 7
  %v277 = vsub.s32 3, %v276
  %v278 = vrot.slane %v261, %v277
  %v291 = vunpack.c.l.b16 %v29
  %v292 = vunpack.c.h.b16 %v29
  %v293 = vunpack.c.l.b16 %v30
  %v294 = vunpack.c.h.b16 %v30
  %v295 = vunpack.c.l.b16 %v31
  %v296 = vunpack.c.h.b16 %v31
  %v297 = vunpack.c.l.b16 %v32
  %v298 = vunpack.c.l.b16 %v33
  %v299 = vunpack.c.h.b16 %v33
  %v300 = vunpack.c.l.b16 %v34
  %v301 = vunpack.c.h.b16 %v34
  %v302 = vunpack.c.l.b16 %v35
  %v303 = vunpack.c.h.b16 %v35
  %v304 = vunpack.c.l.b16 %v36
  %v305 = vpack.c.b16 %v298, %v291
  %v306 = vpack.c.b16 %v299, %v292
  %v307 = vpack.c.b16 %v300, %v293
  %v308 = vpack.c.b16 %v301, %v294
  %v309 = vpack.c.b16 %v302, %v295
  %v310 = vpack.c.b16 %v303, %v296
  %v311 = vpack.c.b16 %v304, %v297
  %v543 = vunpack.c.l.b16 %v37
  %v544 = vunpack.c.h.b16 %v37
  %v545 = vunpack.c.l.b16 %v38
  %v546 = vunpack.c.h.b16 %v38
  %v547 = vunpack.c.l.b16 %v39
  %v548 = vunpack.c.h.b16 %v39
  %v549 = vunpack.c.l.b16 %v40
  %v550 = vunpack.c.h.b16 %v40
  %v551 = vunpack.c.l.b16 %v41
  %v552 = vunpack.c.h.b16 %v41
  %v553 = vunpack.c.l.b16 %v42
  %v554 = vunpack.c.h.b16 %v42
  %v555 = vunpack.c.l.b16 %v43
  %v556 = vunpack.c.h.b16 %v43
  %v557 = vunpack.c.l.b16 %v44
  %v558 = vunpack.c.h.b16 %v44
  %v559 = vunpack.c.l.b16 %v45
  %v560 = vunpack.c.h.b16 %v45
  %v561 = vunpack.c.l.b16 %v46
  %v562 = vunpack.c.h.b16 %v46
  %v563 = vunpack.c.l.b16 %v47
  %v564 = vunpack.c.h.b16 %v47
  %v565 = vunpack.c.l.b16 %v48
  %v566 = vunpack.c.h.b16 %v48
  %v567 = vunpack.c.l.b16 %v49
  %v568 = vunpack.c.h.b16 %v49
  %v569 = vunpack.c.l.b16 %v50
  %v570 = vunpack.c.h.b16 %v50
  %v571 = vunpack.c.l.b16 %v51
  %v572 = vunpack.c.h.b16 %v51
  %v573 = vunpack.c.l.b16 %v52
  %v574 = vunpack.c.h.b16 %v52
  %v575 = vunpack.c.l.b16 %v53
  %v576 = vunpack.c.h.b16 %v53
  %v577 = vunpack.c.l.b16 %v54
  %v578 = vunpack.c.h.b16 %v54
  %v579 = vunpack.c.l.b16 %v55
  %v580 = vunpack.c.h.b16 %v55
  %v581 = vunpack.c.l.b16 %v56
  %v582 = vunpack.c.h.b16 %v56
  %v583 = vunpack.c.l.b16 %v57
  %v584 = vunpack.c.h.b16 %v57
  %v585 = vunpack.c.l.b16 %v58
  %v586 = vunpack.c.h.b16 %v58
  %v587 = vunpack.c.l.b16 %v59
  %v588 = vunpack.c.h.b16 %v59
  %v589 = vunpack.c.l.b16 %v60
  %v590 = vunpack.c.h.b16 %v60
  %v591 = vunpack.c.l.b16 %v61
  %v592 = vunpack.c.h.b16 %v61
  %v593 = vunpack.c.l.b16 %v62
  %v594 = vunpack.c.h.b16 %v62
  %v595 = vunpack.c.l.b16 %v63
  %v596 = vunpack.c.h.b16 %v63
  %v597 = vunpack.c.l.b16 %v64
  %v598 = vunpack.c.h.b16 %v64
  %v599 = vunpack.c.l.b16 %v65
  %v600 = vunpack.c.h.b16 %v65
  %v601 = vunpack.c.l.b16 %v66
  %v602 = vunpack.c.h.b16 %v66
  %v603 = vunpack.c.l.b16 %v67
  %v604 = vunpack.c.h.b16 %v67
  %v605 = vunpack.c.l.b16 %v68
  %v606 = vunpack.c.h.b16 %v68
  %v607 = vunpack.c.l.b16 %v69
  %v608 = vunpack.c.h.b16 %v69
  %v609 = vunpack.c.l.b16 %v70
  %v610 = vunpack.c.h.b16 %v70
  %v611 = vunpack.c.l.b16 %v71
  %v612 = vunpack.c.h.b16 %v71
  %v613 = vunpack.c.l.b16 %v72
  %v614 = vunpack.c.h.b16 %v72
  %v615 = vunpack.c.l.b16 %v73
  %v616 = vunpack.c.h.b16 %v73
  %v617 = vunpack.c.l.b16 %v74
  %v618 = vunpack.c.h.b16 %v74
  %v619 = vunpack.c.l.b16 %v75
  %v620 = vunpack.c.h.b16 %v75
  %v621 = vunpack.c.l.b16 %v76
  %v622 = vunpack.c.h.b16 %v76
  %v623 = vunpack.c.l.b16 %v77
  %v624 = vunpack.c.h.b16 %v77
  %v625 = vunpack.c.l.b16 %v78
  %v626 = vunpack.c.h.b16 %v78
  %v627 = vunpack.c.l.b16 %v79
  %v628 = vunpack.c.h.b16 %v79
  %v629 = vunpack.c.l.b16 %v80
  %v630 = vunpack.c.h.b16 %v80
  %v631 = vunpack.c.l.b16 %v81
  %v632 = vunpack.c.h.b16 %v81
  %v633 = vunpack.c.l.b16 %v82
  %v634 = vunpack.c.h.b16 %v82
  %v635 = vunpack.c.l.b16 %v83
  %v636 = vunpack.c.h.b16 %v83
  %v637 = vunpack.c.l.b16 %v84
  %v638 = vunpack.c.h.b16 %v84
  %v639 = vunpack.c.l.b16 %v85
  %v640 = vunpack.c.h.b16 %v85
  %v641 = vunpack.c.l.b16 %v86
  %v642 = vunpack.c.h.b16 %v86
  %v643 = vunpack.c.l.b16 %v87
  %v644 = vunpack.c.h.b16 %v87
  %v645 = vunpack.c.l.b16 %v88
  %v646 = vunpack.c.h.b16 %v88
  %v647 = vunpack.c.l.b16 %v89
  %v648 = vunpack.c.h.b16 %v89
  %v649 = vunpack.c.l.b16 %v90
  %v650 = vunpack.c.h.b16 %v90
  %v651 = vunpack.c.l.b16 %v91
  %v652 = vunpack.c.h.b16 %v91
  %v653 = vunpack.c.l.b16 %v92
  %v654 = vunpack.c.h.b16 %v92
  %v655 = vunpack.c.l.b16 %v93
  %v656 = vunpack.c.h.b16 %v93
  %v657 = vunpack.c.l.b16 %v94
  %v658 = vunpack.c.h.b16 %v94
  %v659 = vunpack.c.l.b16 %v95
  %v660 = vunpack.c.h.b16 %v95
  %v661 = vunpack.c.l.b16 %v96
  %v662 = vunpack.c.h.b16 %v96
  %v663 = vunpack.c.l.b16 %v97
  %v664 = vunpack.c.h.b16 %v97
  %v665 = vunpack.c.l.b16 %v98
  %v666 = vunpack.c.h.b16 %v98
  %v667 = vunpack.c.l.b16 %v99
  %v668 = vunpack.c.h.b16 %v99
  %v669 = vunpack.c.l.b16 %v100
  %v670 = vunpack.c.h.b16 %v100
  %v671 = vunpack.c.l.b16 %v101
  %v672 = vunpack.c.h.b16 %v101
  %v673 = vunpack.c.l.b16 %v102
  %v674 = vunpack.c.h.b16 %v102
  %v675 = vunpack.c.l.b16 %v103
  %v676 = vunpack.c.h.b16 %v103
  %v677 = vunpack.c.l.b16 %v104
  %v678 = vunpack.c.h.b16 %v104
  %v679 = vunpack.c.l.b16 %v105
  %v680 = vunpack.c.h.b16 %v105
  %v681 = vunpack.c.l.b16 %v106
  %v682 = vunpack.c.h.b16 %v106
  %v683 = vunpack.c.l.b16 %v107
  %v684 = vunpack.c.h.b16 %v107
  %v685 = vunpack.c.l.b16 %v108
  %v686 = vunpack.c.h.b16 %v108
  %v687 = vunpack.c.l.b16 %v109
  %v688 = vunpack.c.h.b16 %v109
  %v689 = vunpack.c.l.b16 %v110
  %v690 = vunpack.c.h.b16 %v110
  %v691 = vunpack.c.l.b16 %v111
  %v692 = vunpack.c.h.b16 %v111
  %v693 = vunpack.c.l.b16 %v112
  %v694 = vunpack.c.h.b16 %v112
  %v695 = vunpack.c.l.b16 %v113
  %v696 = vunpack.c.h.b16 %v113
  %v697 = vunpack.c.l.b16 %v114
  %v698 = vunpack.c.h.b16 %v114
  %v699 = vunpack.c.l.b16 %v115
  %v700 = vunpack.c.h.b16 %v115
  %v701 = vunpack.c.l.b16 %v116
  %v702 = vunpack.c.h.b16 %v116
  %v703 = vunpack.c.l.b16 %v117
  %v704 = vunpack.c.h.b16 %v117
  %v705 = vunpack.c.l.b16 %v118
  %v706 = vunpack.c.h.b16 %v118
  %v707 = vunpack.c.l.b16 %v119
  %v708 = vunpack.c.h.b16 %v119
  %v709 = vunpack.c.l.b16 %v120
  %v710 = vunpack.c.h.b16 %v120
  %v711 = vunpack.c.l.b16 %v121
  %v712 = vunpack.c.h.b16 %v121
  %v713 = vunpack.c.l.b16 %v122
  %v714 = vunpack.c.h.b16 %v122
  %v715 = vunpack.c.l.b16 %v123
  %v716 = vunpack.c.h.b16 %v123
  %v717 = vunpack.c.l.b16 %v124
  %v718 = vunpack.c.h.b16 %v124
  %v719 = vunpack.c.l.b16 %v125
  %v720 = vunpack.c.h.b16 %v125
  %v721 = vunpack.c.l.b16 %v126
  %v722 = vunpack.c.h.b16 %v126
  %v723 = vunpack.c.l.b16 %v127
  %v724 = vunpack.c.h.b16 %v127
  %v725 = vunpack.c.l.b16 %v128
  %v726 = vunpack.c.h.b16 %v128
  %v727 = vunpack.c.l.b16 %v129
  %v728 = vunpack.c.h.b16 %v129
  %v729 = vunpack.c.l.b16 %v130
  %v730 = vunpack.c.h.b16 %v130
  %v731 = vunpack.c.l.b16 %v131
  %v732 = vunpack.c.h.b16 %v131
  %v733 = vunpack.c.l.b16 %v132
  %v734 = vunpack.c.h.b16 %v132
  %v735 = vunpack.c.l.b16 %v133
  %v736 = vunpack.c.h.b16 %v133
  %v737 = vunpack.c.l.b16 %v134
  %v738 = vunpack.c.h.b16 %v134
  %v739 = vunpack.c.l.b16 %v135
  %v740 = vunpack.c.h.b16 %v135
  %v741 = vunpack.c.l.b16 %v136
  %v742 = vunpack.c.h.b16 %v136
  %v743 = vunpack.c.l.b16 %v137
  %v744 = vunpack.c.h.b16 %v137
  %v745 = vunpack.c.l.b16 %v138
  %v746 = vunpack.c.h.b16 %v138
  %v747 = vunpack.c.l.b16 %v139
  %v748 = vunpack.c.h.b16 %v139
  %v749 = vunpack.c.l.b16 %v140
  %v750 = vunpack.c.h.b16 %v140
  %v751 = vunpack.c.l.b16 %v141
  %v752 = vunpack.c.h.b16 %v141
  %v753 = vunpack.c.l.b16 %v142
  %v754 = vunpack.c.h.b16 %v142
  %v755 = vunpack.c.l.b16 %v143
  %v756 = vunpack.c.h.b16 %v143
  %v757 = vunpack.c.l.b16 %v144
  %v758 = vunpack.c.h.b16 %v144
  %v759 = vunpack.c.l.b16 %v145
  %v760 = vunpack.c.h.b16 %v145
  %v761 = vunpack.c.l.b16 %v146
  %v762 = vunpack.c.h.b16 %v146
  %v763 = vunpack.c.l.b16 %v147
  %v764 = vunpack.c.h.b16 %v147
  %v765 = vunpack.c.l.b16 %v148
  %v766 = vunpack.c.h.b16 %v148
  %v767 = vunpack.c.l.b16 %v149
  %v768 = vunpack.c.h.b16 %v149
  %v769 = vunpack.c.l.b16 %v150
  %v770 = vunpack.c.h.b16 %v150
  %v771 = vunpack.c.l.b16 %v151
  %v772 = vunpack.c.h.b16 %v151
  %v773 = vunpack.c.l.b16 %v152
  %v774 = vunpack.c.h.b16 %v152
  %v775 = vunpack.c.l.b16 %v153
  %v776 = vunpack.c.h.b16 %v153
  %v777 = vunpack.c.l.b16 %v154
  %v778 = vunpack.c.h.b16 %v154
  %v779 = vunpack.c.l.b16 %v155
  %v780 = vunpack.c.h.b16 %v155
  %v781 = vunpack.c.l.b16 %v156
  %v782 = vunpack.c.h.b16 %v156
  %v783 = vunpack.c.l.b16 %v157
  %v784 = vunpack.c.h.b16 %v157
  %v785 = vunpack.c.l.b16 %v158
  %v786 = vunpack.c.h.b16 %v158
  %v787 = vunpack.c.l.b16 %v159
  %v788 = vunpack.c.h.b16 %v159
  %v789 = vunpack.c.l.b16 %v160
  %v790 = vunpack.c.h.b16 %v160
  %v791 = vunpack.c.l.b16 %v161
  %v792 = vunpack.c.h.b16 %v161
  %v793 = vunpack.c.l.b16 %v162
  %v794 = vunpack.c.h.b16 %v162
  %v795 = vunpack.c.l.b16 %v163
  %v796 = vunpack.c.h.b16 %v163
  %v797 = vunpack.c.l.b16 %v164
  %v798 = vunpack.c.h.b16 %v164
  %v799 = vunpack.c.l.b16 %v165
  %v800 = vunpack.c.h.b16 %v165
  %v801 = vunpack.c.l.b16 %v166
  %v802 = vunpack.c.h.b16 %v166
  %v803 = vunpack.c.l.b16 %v167
  %v804 = vunpack.c.h.b16 %v167
  %v805 = vunpack.c.l.b16 %v168
  %v806 = vunpack.c.h.b16 %v168
  %v807 = vunpack.c.l.b16 %v169
  %v808 = vunpack.c.h.b16 %v169
  %v809 = vunpack.c.l.b16 %v170
  %v810 = vunpack.c.h.b16 %v170
  %v811 = vunpack.c.l.b16 %v171
  %v812 = vunpack.c.h.b16 %v171
  %v813 = vunpack.c.l.b16 %v172
  %v814 = vunpack.c.h.b16 %v172
  %v815 = vunpack.c.l.b16 %v173
  %v816 = vunpack.c.h.b16 %v173
  %v817 = vunpack.c.l.b16 %v174
  %v818 = vunpack.c.h.b16 %v174
  %v819 = vunpack.c.l.b16 %v175
  %v820 = vunpack.c.h.b16 %v175
  %v821 = vunpack.c.l.b16 %v176
  %v822 = vunpack.c.h.b16 %v176
  %v823 = vunpack.c.l.b16 %v177
  %v824 = vunpack.c.h.b16 %v177
  %v825 = vunpack.c.l.b16 %v178
  %v826 = vunpack.c.h.b16 %v178
  %v827 = vunpack.c.l.b16 %v179
  %v828 = vunpack.c.h.b16 %v179
  %v829 = vunpack.c.l.b16 %v180
  %v830 = vunpack.c.h.b16 %v180
  %v831 = vunpack.c.l.b16 %v181
  %v832 = vunpack.c.h.b16 %v181
  %v833 = vunpack.c.l.b16 %v182
  %v834 = vunpack.c.h.b16 %v182
  %v835 = vunpack.c.l.b16 %v183
  %v836 = vunpack.c.h.b16 %v183
  %v837 = vunpack.c.l.b16 %v184
  %v838 = vunpack.c.h.b16 %v184
  %v839 = vunpack.c.l.b16 %v185
  %v840 = vunpack.c.h.b16 %v185
  %v841 = vunpack.c.l.b16 %v186
  %v842 = vunpack.c.h.b16 %v186
  %v843 = vunpack.c.l.b16 %v187
  %v844 = vunpack.c.h.b16 %v187
  %v845 = vunpack.c.l.b16 %v188
  %v846 = vunpack.c.h.b16 %v188
  %v847 = vunpack.c.l.b16 %v189
  %v848 = vunpack.c.h.b16 %v189
  %v849 = vunpack.c.l.b16 %v190
  %v850 = vunpack.c.h.b16 %v190
  %v851 = vunpack.c.l.b16 %v191
  %v852 = vunpack.c.h.b16 %v191
  %v853 = vunpack.c.l.b16 %v192
  %v854 = vunpack.c.h.b16 %v192
  %v855 = vunpack.c.l.b16 %v193
  %v856 = vunpack.c.h.b16 %v193
  %v857 = vunpack.c.l.b16 %v194
  %v858 = vunpack.c.h.b16 %v194
  %v859 = vunpack.c.l.b16 %v195
  %v860 = vunpack.c.h.b16 %v195
  %v861 = vunpack.c.l.b16 %v196
  %v862 = vunpack.c.h.b16 %v196
  %v863 = vunpack.c.l.b16 %v197
  %v864 = vunpack.c.h.b16 %v197
  %v865 = vunpack.c.l.b16 %v198
  %v866 = vunpack.c.h.b16 %v198
  %v867 = vunpack.c.l.b16 %v199
  %v868 = vunpack.c.h.b16 %v199
  %v869 = vunpack.c.l.b16 %v200
  %v870 = vunpack.c.h.b16 %v200
  %v871 = vunpack.c.l.b16 %v201
  %v872 = vunpack.c.h.b16 %v201
  %v873 = vunpack.c.l.b16 %v202
  %v874 = vunpack.c.h.b16 %v202
  %v875 = vunpack.c.l.b16 %v203
  %v876 = vunpack.c.h.b16 %v203
  %v877 = vunpack.c.l.b16 %v204
  %v878 = vunpack.c.h.b16 %v204
  %v879 = vunpack.c.l.b16 %v205
  %v880 = vunpack.c.h.b16 %v205
  %v881 = vunpack.c.l.b16 %v206
  %v882 = vunpack.c.h.b16 %v206
  %v883 = vunpack.c.l.b16 %v207
  %v884 = vunpack.c.h.b16 %v207
  %v885 = vunpack.c.l.b16 %v208
  %v886 = vunpack.c.h.b16 %v208
  %v887 = vunpack.c.l.b16 %v209
  %v888 = vunpack.c.h.b16 %v209
  %v889 = vunpack.c.l.b16 %v210
  %v890 = vunpack.c.h.b16 %v210
  %v891 = vunpack.c.l.b16 %v211
  %v892 = vunpack.c.h.b16 %v211
  %v893 = vunpack.c.l.b16 %v212
  %v894 = vunpack.c.h.b16 %v212
  %v895 = vunpack.c.l.b16 %v213
  %v896 = vunpack.c.h.b16 %v213
  %v897 = vunpack.c.l.b16 %v214
  %v898 = vunpack.c.h.b16 %v214
  %v899 = vunpack.c.l.b16 %v215
  %v900 = vunpack.c.h.b16 %v215
  %v901 = vunpack.c.l.b16 %v216
  %v902 = vunpack.c.h.b16 %v216
  %v903 = vunpack.c.l.b16 %v217
  %v904 = vunpack.c.h.b16 %v217
  %v905 = vunpack.c.l.b16 %v218
  %v906 = vunpack.c.h.b16 %v218
  %v907 = vunpack.c.l.b16 %v219
  %v908 = vunpack.c.h.b16 %v219
  %v909 = vunpack.c.l.b16 %v220
  %v910 = vunpack.c.h.b16 %v220
  %v911 = vunpack.c.l.b16 %v221
  %v912 = vunpack.c.h.b16 %v221
  %v913 = vunpack.c.l.b16 %v222
  %v914 = vunpack.c.h.b16 %v222
  %v915 = vunpack.c.l.b16 %v223
  %v916 = vunpack.c.h.b16 %v223
  %v917 = vunpack.c.l.b16 %v224
  %v918 = vunpack.c.h.b16 %v224
  %v919 = vunpack.c.l.b16 %v225
  %v920 = vunpack.c.h.b16 %v225
  %v921 = vunpack.c.l.b16 %v226
  %v922 = vunpack.c.h.b16 %v226
  %v923 = vunpack.c.l.b16 %v227
  %v924 = vunpack.c.h.b16 %v227
  %v925 = vunpack.c.l.b16 %v228
  %v926 = vunpack.c.h.b16 %v228
  %v927 = vunpack.c.l.b16 %v229
  %v928 = vunpack.c.h.b16 %v229
  %v929 = vunpack.c.l.b16 %v230
  %v930 = vunpack.c.h.b16 %v230
  %v931 = vunpack.c.l.b16 %v231
  %v932 = vunpack.c.h.b16 %v231
  %v933 = vunpack.c.l.b16 %v232
  %v934 = vunpack.c.h.b16 %v232
  %v935 = vunpack.c.l.b16 %v233
  %v936 = vunpack.c.h.b16 %v233
  %v937 = vunpack.c.l.b16 %v234
  %v938 = vunpack.c.h.b16 %v234
  %v939 = vunpack.c.l.b16 %v235
  %v940 = vunpack.c.h.b16 %v235
  %v941 = vunpack.c.l.b16 %v236
  %v942 = vunpack.c.h.b16 %v236
  %v943 = vunpack.c.l.b16 %v237
  %v944 = vunpack.c.h.b16 %v237
  %v945 = vunpack.c.l.b16 %v238
  %v946 = vunpack.c.h.b16 %v238
  %v947 = vunpack.c.l.b16 %v239
  %v948 = vunpack.c.h.b16 %v239
  %v949 = vunpack.c.l.b16 %v240
  %v950 = vunpack.c.h.b16 %v240
  %v951 = vunpack.c.l.b16 %v241
  %v952 = vunpack.c.h.b16 %v241
  %v953 = vunpack.c.l.b16 %v242
  %v954 = vunpack.c.h.b16 %v242
  %v955 = vunpack.c.l.b16 %v243
  %v956 = vunpack.c.h.b16 %v243
  %v957 = vunpack.c.l.b16 %v244
  %v958 = vunpack.c.h.b16 %v244
  %v959 = vunpack.c.l.b16 %v245
  %v960 = vunpack.c.h.b16 %v245
  %v961 = vunpack.c.l.b16 %v246
  %v962 = vunpack.c.h.b16 %v246
  %v963 = vunpack.c.l.b16 %v247
  %v964 = vunpack.c.h.b16 %v247
  %v965 = vunpack.c.l.b16 %v248
  %v966 = vunpack.c.h.b16 %v248
  %v967 = vunpack.c.l.b16 %v249
  %v968 = vunpack.c.h.b16 %v249
  %v969 = vunpack.c.l.b16 %v250
  %v970 = vunpack.c.h.b16 %v250
  %v971 = vunpack.c.l.b16 %v251
  %v972 = vunpack.c.h.b16 %v251
  %v973 = vunpack.c.l.b16 %v252
  %v974 = vunpack.c.h.b16 %v252
  %v975 = vunpack.c.l.b16 %v253
  %v976 = vunpack.c.h.b16 %v253
  %v977 = vunpack.c.l.b16 %v254
  %v978 = vunpack.c.h.b16 %v254
  %v979 = vunpack.c.l.b16 %v255
  %v980 = vunpack.c.h.b16 %v255
  %v981 = vunpack.c.l.b16 %v256
  %v982 = vunpack.c.h.b16 %v256
  %v983 = vunpack.c.l.b16 %v257
  %v984 = vunpack.c.h.b16 %v257
  %v985 = vunpack.c.l.b16 %v258
  %v986 = vunpack.c.h.b16 %v258
  %v987 = vunpack.c.l.b16 %v259
  %v988 = vunpack.c.h.b16 %v259
  %v989 = vunpack.c.l.b16 %v260
  %v990 = vunpack.c.h.b16 %v260
  %v991 = vpack.c.b16 %v547, %v543
  %v992 = vpack.c.b16 %v548, %v544
  %v993 = vpack.c.b16 %v549, %v545
  %v994 = vpack.c.b16 %v550, %v546
  %v995 = vpack.c.b16 %v555, %v551
  %v996 = vpack.c.b16 %v556, %v552
  %v997 = vpack.c.b16 %v557, %v553
  %v998 = vpack.c.b16 %v558, %v554
  %v999 = vpack.c.b16 %v563, %v559
  %v1000 = vpack.c.b16 %v564, %v560
  %v1001 = vpack.c.b16 %v565, %v561
  %v1002 = vpack.c.b16 %v566, %v562
  %v1003 = vpack.c.b16 %v571, %v567
  %v1004 = vpack.c.b16 %v572, %v568
  %v1005 = vpack.c.b16 %v573, %v569
  %v1006 = vpack.c.b16 %v574, %v570
  %v1007 = vpack.c.b16 %v579, %v575
  %v1008 = vpack.c.b16 %v580, %v576
  %v1009 = vpack.c.b16 %v581, %v577
  %v1010 = vpack.c.b16 %v582, %v578
  %v1011 = vpack.c.b16 %v587, %v583
  %v1012 = vpack.c.b16 %v588, %v584
  %v1013 = vpack.c.b16 %v589, %v585
  %v1014 = vpack.c.b16 %v590, %v586
  %v1015 = vpack.c.b16 %v595, %v591
  %v1016 = vpack.c.b16 %v596, %v592
  %v1017 = vpack.c.b16 %v597, %v593
  %v1018 = vpack.c.b16 %v598, %v594
  %v1019 = vpack.c.b16 %v603, %v599
  %v1020 = vpack.c.b16 %v604, %v600
  %v1021 = vpack.c.b16 %v605, %v601
  %v1022 = vpack.c.b16 %v606, %v602
  %v1023 = vpack.c.b16 %v611, %v607
  %v1024 = vpack.c.b16 %v612, %v608
  %v1025 = vpack.c.b16 %v613, %v609
  %v1026 = vpack.c.b16 %v614, %v610
  %v1027 = vpack.c.b16 %v619, %v615
  %v1028 = vpack.c.b16 %v620, %v616
  %v1029 = vpack.c.b16 %v621, %v617
  %v1030 = vpack.c.b16 %v622, %v618
  %v1031 = vpack.c.b16 %v627, %v623
  %v1032 = vpack.c.b16 %v628, %v624
  %v1033 = vpack.c.b16 %v629, %v625
  %v1034 = vpack.c.b16 %v630, %v626
  %v1035 = vpack.c.b16 %v635, %v631
  %v1036 = vpack.c.b16 %v636, %v632
  %v1037 = vpack.c.b16 %v637, %v633
  %v1038 = vpack.c.b16 %v638, %v634
  %v1039 = vpack.c.b16 %v643, %v639
  %v1040 = vpack.c.b16 %v644, %v640
  %v1041 = vpack.c.b16 %v645, %v641
  %v1042 = vpack.c.b16 %v646, %v642
  %v1043 = vpack.c.b16 %v651, %v647
  %v1044 = vpack.c.b16 %v652, %v648
  %v1045 = vpack.c.b16 %v653, %v649
  %v1046 = vpack.c.b16 %v654, %v650
  %v1047 = vpack.c.b16 %v659, %v655
  %v1048 = vpack.c.b16 %v660, %v656
  %v1049 = vpack.c.b16 %v661, %v657
  %v1050 = vpack.c.b16 %v662, %v658
  %v1051 = vpack.c.b16 %v667, %v663
  %v1052 = vpack.c.b16 %v668, %v664
  %v1053 = vpack.c.b16 %v669, %v665
  %v1054 = vpack.c.b16 %v670, %v666
  %v1055 = vpack.c.b16 %v675, %v671
  %v1056 = vpack.c.b16 %v676, %v672
  %v1057 = vpack.c.b16 %v677, %v673
  %v1058 = vpack.c.b16 %v678, %v674
  %v1059 = vpack.c.b16 %v683, %v679
  %v1060 = vpack.c.b16 %v684, %v680
  %v1061 = vpack.c.b16 %v685, %v681
  %v1062 = vpack.c.b16 %v686, %v682
  %v1063 = vpack.c.b16 %v691, %v687
  %v1064 = vpack.c.b16 %v692, %v688
  %v1065 = vpack.c.b16 %v693, %v689
  %v1066 = vpack.c.b16 %v694, %v690
  %v1067 = vpack.c.b16 %v699, %v695
  %v1068 = vpack.c.b16 %v700, %v696
  %v1069 = vpack.c.b16 %v701, %v697
  %v1070 = vpack.c.b16 %v702, %v698
  %v1071 = vpack.c.b16 %v707, %v703
  %v1072 = vpack.c.b16 %v708, %v704
  %v1073 = vpack.c.b16 %v709, %v705
  %v1074 = vpack.c.b16 %v710, %v706
  %v1075 = vpack.c.b16 %v715, %v711
  %v1076 = vpack.c.b16 %v716, %v712
  %v1077 = vpack.c.b16 %v717, %v713
  %v1078 = vpack.c.b16 %v718, %v714
  %v1079 = vpack.c.b16 %v723, %v719
  %v1080 = vpack.c.b16 %v724, %v720
  %v1081 = vpack.c.b16 %v725, %v721
  %v1082 = vpack.c.b16 %v726, %v722
  %v1083 = vpack.c.b16 %v731, %v727
  %v1084 = vpack.c.b16 %v732, %v728
  %v1085 = vpack.c.b16 %v733, %v729
  %v1086 = vpack.c.b16 %v734, %v730
  %v1087 = vpack.c.b16 %v739, %v735
  %v1088 = vpack.c.b16 %v740, %v736
  %v1089 = vpack.c.b16 %v741, %v737
  %v1090 = vpack.c.b16 %v742, %v738
  %v1091 = vpack.c.b16 %v747, %v743
  %v1092 = vpack.c.b16 %v748, %v744
  %v1093 = vpack.c.b16 %v749, %v745
  %v1094 = vpack.c.b16 %v750, %v746
  %v1095 = vpack.c.b16 %v755, %v751
  %v1096 = vpack.c.b16 %v756, %v752
  %v1097 = vpack.c.b16 %v757, %v753
  %v1098 = vpack.c.b16 %v758, %v754
  %v1099 = vpack.c.b16 %v763, %v759
  %v1100 = vpack.c.b16 %v764, %v760
  %v1101 = vpack.c.b16 %v765, %v761
  %v1102 = vpack.c.b16 %v766, %v762
  %v1103 = vpack.c.b16 %v771, %v767
  %v1104 = vpack.c.b16 %v772, %v768
  %v1105 = vpack.c.b16 %v773, %v769
  %v1106 = vpack.c.b16 %v774, %v770
  %v1107 = vpack.c.b16 %v779, %v775
  %v1108 = vpack.c.b16 %v780, %v776
  %v1109 = vpack.c.b16 %v781, %v777
  %v1110 = vpack.c.b16 %v782, %v778
  %v1111 = vpack.c.b16 %v787, %v783
  %v1112 = vpack.c.b16 %v788, %v784
  %v1113 = vpack.c.b16 %v789, %v785
  %v1114 = vpack.c.b16 %v790, %v786
  %v1115 = vpack.c.b16 %v795, %v791
  %v1116 = vpack.c.b16 %v796, %v792
  %v1117 = vpack.c.b16 %v797, %v793
  %v1118 = vpack.c.b16 %v798, %v794
  %v1119 = vpack.c.b16 %v803, %v799
  %v1120 = vpack.c.b16 %v804, %v800
  %v1121 = vpack.c.b16 %v805, %v801
  %v1122 = vpack.c.b16 %v806, %v802
  %v1123 = vpack.c.b16 %v811, %v807
  %v1124 = vpack.c.b16 %v812, %v808
  %v1125 = vpack.c.b16 %v813, %v809
  %v1126 = vpack.c.b16 %v814, %v810
  %v1127 = vpack.c.b16 %v819, %v815
  %v1128 = vpack.c.b16 %v820, %v816
  %v1129 = vpack.c.b16 %v821, %v817
  %v1130 = vpack.c.b16 %v822, %v818
  %v1131 = vpack.c.b16 %v827, %v823
  %v1132 = vpack.c.b16 %v828, %v824
  %v1133 = vpack.c.b16 %v829, %v825
  %v1134 = vpack.c.b16 %v830, %v826
  %v1135 = vpack.c.b16 %v835, %v831
  %v1136 = vpack.c.b16 %v836, %v832
  %v1137 = vpack.c.b16 %v837, %v833
  %v1138 = vpack.c.b16 %v838, %v834
  %v1139 = vpack.c.b16 %v843, %v839
  %v1140 = vpack.c.b16 %v844, %v840
  %v1141 = vpack.c.b16 %v845, %v841
  %v1142 = vpack.c.b16 %v846, %v842
  %v1143 = vpack.c.b16 %v851, %v847
  %v1144 = vpack.c.b16 %v852, %v848
  %v1145 = vpack.c.b16 %v853, %v849
  %v1146 = vpack.c.b16 %v854, %v850
  %v1147 = vpack.c.b16 %v859, %v855
  %v1148 = vpack.c.b16 %v860, %v856
  %v1149 = vpack.c.b16 %v861, %v857
  %v1150 = vpack.c.b16 %v862, %v858
  %v1151 = vpack.c.b16 %v867, %v863
  %v1152 = vpack.c.b16 %v868, %v864
  %v1153 = vpack.c.b16 %v869, %v865
  %v1154 = vpack.c.b16 %v870, %v866
  %v1155 = vpack.c.b16 %v875, %v871
  %v1156 = vpack.c.b16 %v876, %v872
  %v1157 = vpack.c.b16 %v877, %v873
  %v1158 = vpack.c.b16 %v878, %v874
  %v1159 = vpack.c.b16 %v883, %v879
  %v1160 = vpack.c.b16 %v884, %v880
  %v1161 = vpack.c.b16 %v885, %v881
  %v1162 = vpack.c.b16 %v886, %v882
  %v1163 = vpack.c.b16 %v891, %v887
  %v1164 = vpack.c.b16 %v892, %v888
  %v1165 = vpack.c.b16 %v893, %v889
  %v1166 = vpack.c.b16 %v894, %v890
  %v1167 = vpack.c.b16 %v899, %v895
  %v1168 = vpack.c.b16 %v900, %v896
  %v1169 = vpack.c.b16 %v901, %v897
  %v1170 = vpack.c.b16 %v902, %v898
  %v1171 = vpack.c.b16 %v907, %v903
  %v1172 = vpack.c.b16 %v908, %v904
  %v1173 = vpack.c.b16 %v909, %v905
  %v1174 = vpack.c.b16 %v910, %v906
  %v1175 = vpack.c.b16 %v915, %v911
  %v1176 = vpack.c.b16 %v916, %v912
  %v1177 = vpack.c.b16 %v917, %v913
  %v1178 = vpack.c.b16 %v918, %v914
  %v1179 = vpack.c.b16 %v923, %v919
  %v1180 = vpack.c.b16 %v924, %v920
  %v1181 = vpack.c.b16 %v925, %v921
  %v1182 = vpack.c.b16 %v926, %v922
  %v1183 = vpack.c.b16 %v931, %v927
  %v1184 = vpack.c.b16 %v932, %v928
  %v1185 = vpack.c.b16 %v933, %v929
  %v1186 = vpack.c.b16 %v934, %v930
  %v1187 = vpack.c.b16 %v939, %v935
  %v1188 = vpack.c.b16 %v940, %v936
  %v1189 = vpack.c.b16 %v941, %v937
  %v1190 = vpack.c.b16 %v942, %v938
  %v1191 = vpack.c.b16 %v947, %v943
  %v1192 = vpack.c.b16 %v948, %v944
  %v1193 = vpack.c.b16 %v949, %v945
  %v1194 = vpack.c.b16 %v950, %v946
  %v1195 = vpack.c.b16 %v955, %v951
  %v1196 = vpack.c.b16 %v956, %v952
  %v1197 = vpack.c.b16 %v957, %v953
  %v1198 = vpack.c.b16 %v958, %v954
  %v1199 = vpack.c.b16 %v963, %v959
  %v1200 = vpack.c.b16 %v964, %v960
  %v1201 = vpack.c.b16 %v965, %v961
  %v1202 = vpack.c.b16 %v966, %v962
  %v1203 = vpack.c.b16 %v971, %v967
  %v1204 = vpack.c.b16 %v972, %v968
  %v1205 = vpack.c.b16 %v973, %v969
  %v1206 = vpack.c.b16 %v974, %v970
  %v1207 = vpack.c.b16 %v979, %v975
  %v1208 = vpack.c.b16 %v980, %v976
  %v1209 = vpack.c.b16 %v981, %v977
  %v1210 = vpack.c.b16 %v982, %v978
  %v1211 = vpack.c.b16 %v987, %v983
  %v1212 = vpack.c.b16 %v988, %v984
  %v1213 = vpack.c.b16 %v989, %v985
  %v1214 = vpack.c.b16 %v990, %v986
  %1439 = vmatprep.subr.bf16.mxu0 %v1020
  %1440 = vmatpush1.bf16.msra.mxu0 %v1019
  %1441 = vmatprep.subr.bf16.mxu0 %v1016
  %1442 = vmatpush1.bf16.msra.mxu0 %v1015
  %1443 = vmatprep.subr.bf16.mxu0 %v1012
  %1444 = vmatpush1.bf16.msra.mxu0 %v1011
  %1445 = vmatprep.subr.bf16.mxu0 %v1008
  %1446 = vmatpush1.bf16.msra.mxu0 %v1007
  %1447 = vmatprep.subr.bf16.mxu0 %v1004
  %1448 = vmatpush1.bf16.msra.mxu0 %v1003
  %1449 = vmatprep.subr.bf16.mxu0 %v1000
  %1450 = vmatpush1.bf16.msra.mxu0 %v999
  %1451 = vmatprep.subr.bf16.mxu0 %v996
  %1452 = vmatpush1.bf16.msra.mxu0 %v995
  %1453 = vmatprep.subr.bf16.mxu0 %v992
  %1454 = vmatpush1.bf16.msra.mxu0 %v991
  %1455 = vmatprep.subr.bf16.mxu0 %v1052
  %1456 = vmatpush2.bf16.msra.mxu0 %v1051
  %1457 = vmatprep.subr.bf16.mxu0 %v1048
  %1458 = vmatpush2.bf16.msra.mxu0 %v1047
  %1459 = vmatprep.subr.bf16.mxu0 %v1044
  %1460 = vmatpush2.bf16.msra.mxu0 %v1043
  %1461 = vmatprep.subr.bf16.mxu0 %v1040
  %1462 = vmatpush2.bf16.msra.mxu0 %v1039
  %1463 = vmatprep.subr.bf16.mxu0 %v1036
  %1464 = vmatpush2.bf16.msra.mxu0 %v1035
  %1465 = vmatprep.subr.bf16.mxu0 %v1032
  %1466 = vmatpush2.bf16.msra.mxu0 %v1031
  %1467 = vmatprep.subr.bf16.mxu0 %v1028
  %1468 = vmatpush2.bf16.msra.mxu0 %v1027
  %1469 = vmatprep.subr.bf16.mxu0 %v1024
  %1470 = vmatpush2.bf16.msra.mxu0 %v1023
  %1471 = vmatprep.mubr.bf16.mxu0 %v306
  %1472 = vmatmul.mubr.bf16.gmra.mxu0 %v305
  %v1473 = vpop.f32.mrf.mxu0
  %v1474 = vadd.f32 %v266, %v1473
  %v1475 = vpop.f32.mrf.mxu0
  %v1476 = vadd.f32 %v270, %v1475
  %v1477 = vpop.f32.mrf.mxu0
  %v1478 = vadd.f32 %v266, %v1477
  %v1479 = vpop.f32.mrf.mxu0
  %v1480 = vadd.f32 %v270, %v1479
  %1481 = vdwg.mxu0
  %1482 = vmatprep.subr.bf16.mxu0 %v1084
  %1483 = vmatpush1.bf16.msra.mxu0 %v1083
  %1484 = vmatprep.subr.bf16.mxu0 %v1080
  %1485 = vmatpush1.bf16.msra.mxu0 %v1079
  %1486 = vmatprep.subr.bf16.mxu0 %v1076
  %1487 = vmatpush1.bf16.msra.mxu0 %v1075
  %1488 = vmatprep.subr.bf16.mxu0 %v1072
  %1489 = vmatpush1.bf16.msra.mxu0 %v1071
  %1490 = vmatprep.subr.bf16.mxu0 %v1068
  %1491 = vmatpush1.bf16.msra.mxu0 %v1067
  %1492 = vmatprep.subr.bf16.mxu0 %v1064
  %1493 = vmatpush1.bf16.msra.mxu0 %v1063
  %1494 = vmatprep.subr.bf16.mxu0 %v1060
  %1495 = vmatpush1.bf16.msra.mxu0 %v1059
  %1496 = vmatprep.subr.bf16.mxu0 %v1056
  %1497 = vmatpush1.bf16.msra.mxu0 %v1055
  %1498 = vmatprep.subr.bf16.mxu0 %v1116
  %1499 = vmatpush2.bf16.msra.mxu0 %v1115
  %1500 = vmatprep.subr.bf16.mxu0 %v1112
  %1501 = vmatpush2.bf16.msra.mxu0 %v1111
  %1502 = vmatprep.subr.bf16.mxu0 %v1108
  %1503 = vmatpush2.bf16.msra.mxu0 %v1107
  %1504 = vmatprep.subr.bf16.mxu0 %v1104
  %1505 = vmatpush2.bf16.msra.mxu0 %v1103
  %1506 = vmatprep.subr.bf16.mxu0 %v1100
  %1507 = vmatpush2.bf16.msra.mxu0 %v1099
  %1508 = vmatprep.subr.bf16.mxu0 %v1096
  %1509 = vmatpush2.bf16.msra.mxu0 %v1095
  %1510 = vmatprep.subr.bf16.mxu0 %v1092
  %1511 = vmatpush2.bf16.msra.mxu0 %v1091
  %1512 = vmatprep.subr.bf16.mxu0 %v1088
  %1513 = vmatpush2.bf16.msra.mxu0 %v1087
  %1514 = vmatprep.mubr.bf16.mxu0 %v308
  %1515 = vmatmul.mubr.bf16.gmra.mxu0 %v307
  %v1516 = vpop.f32.mrf.mxu0
  %v1517 = vadd.f32 %v1474, %v1516
  %v1518 = vpop.f32.mrf.mxu0
  %v1519 = vadd.f32 %v1476, %v1518
  %v1520 = vpop.f32.mrf.mxu0
  %v1521 = vadd.f32 %v1478, %v1520
  %v1522 = vpop.f32.mrf.mxu0
  %v1523 = vadd.f32 %v1480, %v1522
  %1524 = vdwg.mxu0
  %1525 = vmatprep.subr.bf16.mxu0 %v1148
  %1526 = vmatpush1.bf16.msra.mxu0 %v1147
  %1527 = vmatprep.subr.bf16.mxu0 %v1144
  %1528 = vmatpush1.bf16.msra.mxu0 %v1143
  %1529 = vmatprep.subr.bf16.mxu0 %v1140
  %1530 = vmatpush1.bf16.msra.mxu0 %v1139
  %1531 = vmatprep.subr.bf16.mxu0 %v1136
  %1532 = vmatpush1.bf16.msra.mxu0 %v1135
  %1533 = vmatprep.subr.bf16.mxu0 %v1132
  %1534 = vmatpush1.bf16.msra.mxu0 %v1131
  %1535 = vmatprep.subr.bf16.mxu0 %v1128
  %1536 = vmatpush1.bf16.msra.mxu0 %v1127
  %1537 = vmatprep.subr.bf16.mxu0 %v1124
  %1538 = vmatpush1.bf16.msra.mxu0 %v1123
  %1539 = vmatprep.subr.bf16.mxu0 %v1120
  %1540 = vmatpush1.bf16.msra.mxu0 %v1119
  %1541 = vmatprep.subr.bf16.mxu0 %v1180
  %1542 = vmatpush2.bf16.msra.mxu0 %v1179
  %1543 = vmatprep.subr.bf16.mxu0 %v1176
  %1544 = vmatpush2.bf16.msra.mxu0 %v1175
  %1545 = vmatprep.subr.bf16.mxu0 %v1172
  %1546 = vmatpush2.bf16.msra.mxu0 %v1171
  %1547 = vmatprep.subr.bf16.mxu0 %v1168
  %1548 = vmatpush2.bf16.msra.mxu0 %v1167
  %1549 = vmatprep.subr.bf16.mxu0 %v1164
  %1550 = vmatpush2.bf16.msra.mxu0 %v1163
  %1551 = vmatprep.subr.bf16.mxu0 %v1160
  %1552 = vmatpush2.bf16.msra.mxu0 %v1159
  %1553 = vmatprep.subr.bf16.mxu0 %v1156
  %1554 = vmatpush2.bf16.msra.mxu0 %v1155
  %1555 = vmatprep.subr.bf16.mxu0 %v1152
  %1556 = vmatpush2.bf16.msra.mxu0 %v1151
  %1557 = vmatprep.mubr.bf16.mxu0 %v310
  %1558 = vmatmul.mubr.bf16.gmra.mxu0 %v309
  %v1559 = vpop.f32.mrf.mxu0
  %v1560 = vadd.f32 %v1517, %v1559
  %v1561 = vpop.f32.mrf.mxu0
  %v1562 = vadd.f32 %v1519, %v1561
  %v1563 = vpop.f32.mrf.mxu0
  %v1564 = vadd.f32 %v1521, %v1563
  %v1565 = vpop.f32.mrf.mxu0
  %v1566 = vadd.f32 %v1523, %v1565
  %1567 = vdwg.mxu0
  %1568 = vmatprep.subr.bf16.mxu0 %v1212
  %1569 = vmatpush1.bf16.msra.mxu0 %v1211
  %1570 = vmatprep.subr.bf16.mxu0 %v1208
  %1571 = vmatpush1.bf16.msra.mxu0 %v1207
  %1572 = vmatprep.subr.bf16.mxu0 %v1204
  %1573 = vmatpush1.bf16.msra.mxu0 %v1203
  %1574 = vmatprep.subr.bf16.mxu0 %v1200
  %1575 = vmatpush1.bf16.msra.mxu0 %v1199
  %1576 = vmatprep.subr.bf16.mxu0 %v1196
  %1577 = vmatpush1.bf16.msra.mxu0 %v1195
  %1578 = vmatprep.subr.bf16.mxu0 %v1192
  %1579 = vmatpush1.bf16.msra.mxu0 %v1191
  %1580 = vmatprep.subr.bf16.mxu0 %v1188
  %1581 = vmatpush1.bf16.msra.mxu0 %v1187
  %1582 = vmatprep.subr.bf16.mxu0 %v1184
  %1583 = vmatpush1.bf16.msra.mxu0 %v1183
  %1584 = vmatprep.subr.bf16.mxu0 0
  %1585 = vmatpush2.bf16.msra.mxu0 0
  %1586 = vmatprep.subr.bf16.mxu0 0
  %1587 = vmatpush2.bf16.msra.mxu0 0
  %1588 = vmatprep.subr.bf16.mxu0 0
  %1589 = vmatpush2.bf16.msra.mxu0 0
  %1590 = vmatprep.subr.bf16.mxu0 0
  %1591 = vmatpush2.bf16.msra.mxu0 0
  %1592 = vmatprep.subr.bf16.mxu0 0
  %1593 = vmatpush2.bf16.msra.mxu0 0
  %1594 = vmatprep.subr.bf16.mxu0 0
  %1595 = vmatpush2.bf16.msra.mxu0 0
  %1596 = vmatprep.subr.bf16.mxu0 0
  %1597 = vmatpush2.bf16.msra.mxu0 0
  %1598 = vmatprep.subr.bf16.mxu0 0
  %1599 = vmatpush2.bf16.msra.mxu0 0
  %1600 = vmatprep.mubr.bf16.mxu0 0
  %1601 = vmatmul.mubr.bf16.gmra.mxu0 %v311
  %v1602 = vpop.f32.mrf.mxu0
  %v1603 = vadd.f32 %v1560, %v1602
  %v1604 = vpop.f32.mrf.mxu0
  %v1605 = vadd.f32 %v1562, %v1604
  %v1606 = vpop.f32.mrf.mxu0
  %v1607 = vadd.f32 %v1564, %v1606
  %v1608 = vpop.f32.mrf.mxu0
  %v1609 = vadd.f32 %v1566, %v1608
  %1610 = vdwg.mxu0
  %1611 = vmatprep.subr.bf16.mxu0 %v1022
  %1612 = vmatpush1.bf16.msra.mxu0 %v1021
  %1613 = vmatprep.subr.bf16.mxu0 %v1018
  %1614 = vmatpush1.bf16.msra.mxu0 %v1017
  %1615 = vmatprep.subr.bf16.mxu0 %v1014
  %1616 = vmatpush1.bf16.msra.mxu0 %v1013
  %1617 = vmatprep.subr.bf16.mxu0 %v1010
  %1618 = vmatpush1.bf16.msra.mxu0 %v1009
  %1619 = vmatprep.subr.bf16.mxu0 %v1006
  %1620 = vmatpush1.bf16.msra.mxu0 %v1005
  %1621 = vmatprep.subr.bf16.mxu0 %v1002
  %1622 = vmatpush1.bf16.msra.mxu0 %v1001
  %1623 = vmatprep.subr.bf16.mxu0 %v998
  %1624 = vmatpush1.bf16.msra.mxu0 %v997
  %1625 = vmatprep.subr.bf16.mxu0 %v994
  %1626 = vmatpush1.bf16.msra.mxu0 %v993
  %1627 = vmatprep.subr.bf16.mxu0 %v1054
  %1628 = vmatpush2.bf16.msra.mxu0 %v1053
  %1629 = vmatprep.subr.bf16.mxu0 %v1050
  %1630 = vmatpush2.bf16.msra.mxu0 %v1049
  %1631 = vmatprep.subr.bf16.mxu0 %v1046
  %1632 = vmatpush2.bf16.msra.mxu0 %v1045
  %1633 = vmatprep.subr.bf16.mxu0 %v1042
  %1634 = vmatpush2.bf16.msra.mxu0 %v1041
  %1635 = vmatprep.subr.bf16.mxu0 %v1038
  %1636 = vmatpush2.bf16.msra.mxu0 %v1037
  %1637 = vmatprep.subr.bf16.mxu0 %v1034
  %1638 = vmatpush2.bf16.msra.mxu0 %v1033
  %1639 = vmatprep.subr.bf16.mxu0 %v1030
  %1640 = vmatpush2.bf16.msra.mxu0 %v1029
  %1641 = vmatprep.subr.bf16.mxu0 %v1026
  %1642 = vmatpush2.bf16.msra.mxu0 %v1025
  %1643 = vmatprep.mubr.bf16.mxu0 %v306
  %1644 = vmatmul.mubr.bf16.gmra.mxu0 %v305
  %v1645 = vpop.f32.mrf.mxu0
  %v1646 = vadd.f32 %v274, %v1645
  %v1647 = vpop.f32.mrf.mxu0
  %v1648 = vadd.f32 %v278, %v1647
  %v1649 = vpop.f32.mrf.mxu0
  %v1650 = vadd.f32 %v274, %v1649
  %v1651 = vpop.f32.mrf.mxu0
  %v1652 = vadd.f32 %v278, %v1651
  %1653 = vdwg.mxu0
  %1654 = vmatprep.subr.bf16.mxu0 %v1086
  %1655 = vmatpush1.bf16.msra.mxu0 %v1085
  %1656 = vmatprep.subr.bf16.mxu0 %v1082
  %1657 = vmatpush1.bf16.msra.mxu0 %v1081
  %1658 = vmatprep.subr.bf16.mxu0 %v1078
  %1659 = vmatpush1.bf16.msra.mxu0 %v1077
  %1660 = vmatprep.subr.bf16.mxu0 %v1074
  %1661 = vmatpush1.bf16.msra.mxu0 %v1073
  %1662 = vmatprep.subr.bf16.mxu0 %v1070
  %1663 = vmatpush1.bf16.msra.mxu0 %v1069
  %1664 = vmatprep.subr.bf16.mxu0 %v1066
  %1665 = vmatpush1.bf16.msra.mxu0 %v1065
  %1666 = vmatprep.subr.bf16.mxu0 %v1062
  %1667 = vmatpush1.bf16.msra.mxu0 %v1061
  %1668 = vmatprep.subr.bf16.mxu0 %v1058
  %1669 = vmatpush1.bf16.msra.mxu0 %v1057
  %1670 = vmatprep.subr.bf16.mxu0 %v1118
  %1671 = vmatpush2.bf16.msra.mxu0 %v1117
  %1672 = vmatprep.subr.bf16.mxu0 %v1114
  %1673 = vmatpush2.bf16.msra.mxu0 %v1113
  %1674 = vmatprep.subr.bf16.mxu0 %v1110
  %1675 = vmatpush2.bf16.msra.mxu0 %v1109
  %1676 = vmatprep.subr.bf16.mxu0 %v1106
  %1677 = vmatpush2.bf16.msra.mxu0 %v1105
  %1678 = vmatprep.subr.bf16.mxu0 %v1102
  %1679 = vmatpush2.bf16.msra.mxu0 %v1101
  %1680 = vmatprep.subr.bf16.mxu0 %v1098
  %1681 = vmatpush2.bf16.msra.mxu0 %v1097
  %1682 = vmatprep.subr.bf16.mxu0 %v1094
  %1683 = vmatpush2.bf16.msra.mxu0 %v1093
  %1684 = vmatprep.subr.bf16.mxu0 %v1090
  %1685 = vmatpush2.bf16.msra.mxu0 %v1089
  %1686 = vmatprep.mubr.bf16.mxu0 %v308
  %1687 = vmatmul.mubr.bf16.gmra.mxu0 %v307
  %v1688 = vpop.f32.mrf.mxu0
  %v1689 = vadd.f32 %v1646, %v1688
  %v1690 = vpop.f32.mrf.mxu0
  %v1691 = vadd.f32 %v1648, %v1690
  %v1692 = vpop.f32.mrf.mxu0
  %v1693 = vadd.f32 %v1650, %v1692
  %v1694 = vpop.f32.mrf.mxu0
  %v1695 = vadd.f32 %v1652, %v1694
  %1696 = vdwg.mxu0
  %1697 = vmatprep.subr.bf16.mxu0 %v1150
  %1698 = vmatpush1.bf16.msra.mxu0 %v1149
  %1699 = vmatprep.subr.bf16.mxu0 %v1146
  %1700 = vmatpush1.bf16.msra.mxu0 %v1145
  %1701 = vmatprep.subr.bf16.mxu0 %v1142
  %1702 = vmatpush1.bf16.msra.mxu0 %v1141
  %1703 = vmatprep.subr.bf16.mxu0 %v1138
  %1704 = vmatpush1.bf16.msra.mxu0 %v1137
  %1705 = vmatprep.subr.bf16.mxu0 %v1134
  %1706 = vmatpush1.bf16.msra.mxu0 %v1133
  %1707 = vmatprep.subr.bf16.mxu0 %v1130
  %1708 = vmatpush1.bf16.msra.mxu0 %v1129
  %1709 = vmatprep.subr.bf16.mxu0 %v1126
  %1710 = vmatpush1.bf16.msra.mxu0 %v1125
  %1711 = vmatprep.subr.bf16.mxu0 %v1122
  %1712 = vmatpush1.bf16.msra.mxu0 %v1121
  %1713 = vmatprep.subr.bf16.mxu0 %v1182
  %1714 = vmatpush2.bf16.msra.mxu0 %v1181
  %1715 = vmatprep.subr.bf16.mxu0 %v1178
  %1716 = vmatpush2.bf16.msra.mxu0 %v1177
  %1717 = vmatprep.subr.bf16.mxu0 %v1174
  %1718 = vmatpush2.bf16.msra.mxu0 %v1173
  %1719 = vmatprep.subr.bf16.mxu0 %v1170
  %1720 = vmatpush2.bf16.msra.mxu0 %v1169
  %1721 = vmatprep.subr.bf16.mxu0 %v1166
  %1722 = vmatpush2.bf16.msra.mxu0 %v1165
  %1723 = vmatprep.subr.bf16.mxu0 %v1162
  %1724 = vmatpush2.bf16.msra.mxu0 %v1161
  %1725 = vmatprep.subr.bf16.mxu0 %v1158
  %1726 = vmatpush2.bf16.msra.mxu0 %v1157
  %1727 = vmatprep.subr.bf16.mxu0 %v1154
  %1728 = vmatpush2.bf16.msra.mxu0 %v1153
  %1729 = vmatprep.mubr.bf16.mxu0 %v310
  %1730 = vmatmul.mubr.bf16.gmra.mxu0 %v309
  %v1731 = vpop.f32.mrf.mxu0
  %v1732 = vadd.f32 %v1689, %v1731
  %v1733 = vpop.f32.mrf.mxu0
  %v1734 = vadd.f32 %v1691, %v1733
  %v1735 = vpop.f32.mrf.mxu0
  %v1736 = vadd.f32 %v1693, %v1735
  %v1737 = vpop.f32.mrf.mxu0
  %v1738 = vadd.f32 %v1695, %v1737
  %1739 = vdwg.mxu0
  %1740 = vmatprep.subr.bf16.mxu0 %v1214
  %1741 = vmatpush1.bf16.msra.mxu0 %v1213
  %1742 = vmatprep.subr.bf16.mxu0 %v1210
  %1743 = vmatpush1.bf16.msra.mxu0 %v1209
  %1744 = vmatprep.subr.bf16.mxu0 %v1206
  %1745 = vmatpush1.bf16.msra.mxu0 %v1205
  %1746 = vmatprep.subr.bf16.mxu0 %v1202
  %1747 = vmatpush1.bf16.msra.mxu0 %v1201
  %1748 = vmatprep.subr.bf16.mxu0 %v1198
  %1749 = vmatpush1.bf16.msra.mxu0 %v1197
  %1750 = vmatprep.subr.bf16.mxu0 %v1194
  %1751 = vmatpush1.bf16.msra.mxu0 %v1193
  %1752 = vmatprep.subr.bf16.mxu0 %v1190
  %1753 = vmatpush1.bf16.msra.mxu0 %v1189
  %1754 = vmatprep.subr.bf16.mxu0 %v1186
  %1755 = vmatpush1.bf16.msra.mxu0 %v1185
  %1756 = vmatprep.subr.bf16.mxu0 0
  %1757 = vmatpush2.bf16.msra.mxu0 0
  %1758 = vmatprep.subr.bf16.mxu0 0
  %1759 = vmatpush2.bf16.msra.mxu0 0
  %1760 = vmatprep.subr.bf16.mxu0 0
  %1761 = vmatpush2.bf16.msra.mxu0 0
  %1762 = vmatprep.subr.bf16.mxu0 0
  %1763 = vmatpush2.bf16.msra.mxu0 0
  %1764 = vmatprep.subr.bf16.mxu0 0
  %1765 = vmatpush2.bf16.msra.mxu0 0
  %1766 = vmatprep.subr.bf16.mxu0 0
  %1767 = vmatpush2.bf16.msra.mxu0 0
  %1768 = vmatprep.subr.bf16.mxu0 0
  %1769 = vmatpush2.bf16.msra.mxu0 0
  %1770 = vmatprep.subr.bf16.mxu0 0
  %1771 = vmatpush2.bf16.msra.mxu0 0
  %1772 = vmatprep.mubr.bf16.mxu0 0
  %1773 = vmatmul.mubr.bf16.gmra.mxu0 %v311
  %v1774 = vpop.f32.mrf.mxu0
  %v1775 = vadd.f32 %v1732, %v1774
  %v1776 = vpop.f32.mrf.mxu0
  %v1777 = vadd.f32 %v1734, %v1776
  %v1778 = vpop.f32.mrf.mxu0
  %v1779 = vadd.f32 %v1736, %v1778
  %v1780 = vpop.f32.mrf.mxu0
  %v1781 = vadd.f32 %v1738, %v1780
  %1782 = vdwg.mxu0
  %vm1783 = vcmp.gt.f32.partialorder %v1603, 0.0
  %vm1784 = vcmp.gt.f32.partialorder %v1605, 0.0
  %vm1785 = vcmp.gt.f32.partialorder %v1775, 0.0
  %vm1786 = vcmp.gt.f32.partialorder %v1777, 0.0
  %vm1787 = vcmp.gt.f32.partialorder %v1607, 0.0
  %vm1788 = vcmp.gt.f32.partialorder %v1609, 0.0
  %vm1789 = vcmp.gt.f32.partialorder %v1779, 0.0
  %vm1790 = vcmp.gt.f32.partialorder %v1781, 0.0
  %v1791 = vmul.f32 %v1603, 0.2
  %v1792 = vmul.f32 %v1605, 0.2
  %v1793 = vmul.f32 %v1775, 0.2
  %v1794 = vmul.f32 %v1777, 0.2
  %v1795 = vmul.f32 %v1607, 0.2
  %v1796 = vmul.f32 %v1609, 0.2
  %v1797 = vmul.f32 %v1779, 0.2
  %v1798 = vmul.f32 %v1781, 0.2
  %v1799 = vsel %vm1783, %v1603, %v1791
  %v1800 = vsel %vm1784, %v1605, %v1792
  %v1801 = vsel %vm1785, %v1775, %v1793
  %v1802 = vsel %vm1786, %v1777, %v1794
  %v1803 = vsel %vm1787, %v1607, %v1795
  %v1804 = vsel %vm1788, %v1609, %v1796
  %v1805 = vsel %vm1789, %v1779, %v1797
  %v1806 = vsel %vm1790, %v1781, %v1798
  %v1807 = vpack.c.bf16 %v1803, %v1799
  %v1808 = vpack.c.bf16 %v1804, %v1800
  %v1809 = vpack.c.bf16 %v1805, %v1801
  %v1810 = vpack.c.bf16 %v1806, %v1802
  %v1811 = vld [vmem:[%s3] sm:$0xff]
  %v1812 = vld [vmem:[%s3 + $0x8] sm:$0xff]
  %v1813 = vld [vmem:[%s3 + $0x10] sm:$0xff]
  %v1814 = vld [vmem:[%s3 + $0x18] sm:$0xff]
  %v1815 = vld [vmem:[%s3 + $0x20] sm:$0xff]
  %v1816 = vld [vmem:[%s3 + $0x28] sm:$0xff]
  %v1817 = vld [vmem:[%s3 + $0x30] sm:$0xff]
  %v1818 = vld [vmem:[%s3 + $0x38] sm:$0xff]
  %v1819 = vld [vmem:[%s3 + $0x40] sm:$0xff]
  %v1820 = vld [vmem:[%s3 + $0x48] sm:$0xff]
  %v1821 = vld [vmem:[%s3 + $0x50] sm:$0xff]
  %v1822 = vld [vmem:[%s3 + $0x58] sm:$0xff]
  %v1823 = vld [vmem:[%s3 + $0x60] sm:$0xff]
  %v1824 = vld [vmem:[%s3 + $0x68] sm:$0xff]
  %v1825 = vld [vmem:[%s3 + $0x70] sm:$0xff]
  %v1826 = vld [vmem:[%s3 + $0x78] sm:$0xff]
  %v1827 = vld [vmem:[%s3 + $0x80] sm:$0xff]
  %v1828 = vld [vmem:[%s3 + $0x88] sm:$0xff]
  %v1829 = vld [vmem:[%s3 + $0x90] sm:$0xff]
  %v1830 = vld [vmem:[%s3 + $0x98] sm:$0xff]
  %v1831 = vld [vmem:[%s3 + $0xa0] sm:$0xff]
  %v1832 = vld [vmem:[%s3 + $0xa8] sm:$0xff]
  %v1833 = vld [vmem:[%s3 + $0xb0] sm:$0xff]
  %v1834 = vld [vmem:[%s3 + $0xb8] sm:$0xff]
  %v1835 = vld [vmem:[%s3 + $0xc0] sm:$0xff]
  %v1836 = vld [vmem:[%s3 + $0xc8] sm:$0xff]
  %v1837 = vld [vmem:[%s3 + $0xd0] sm:$0xff]
  %v1838 = vld [vmem:[%s3 + $0xd8] sm:$0xff]
  %v1839 = vld [vmem:[%s3 + $0xe0] sm:$0xff]
  %v1840 = vld [vmem:[%s3 + $0xe8] sm:$0xff]
  %v1841 = vld [vmem:[%s3 + $0xf0] sm:$0xff]
  %v1842 = vld [vmem:[%s3 + $0xf8] sm:$0xff]
  %v1843 = vld [vmem:[%s3 + $0x100] sm:$0xff]
  %v1844 = vld [vmem:[%s3 + $0x108] sm:$0xff]
  %v1845 = vld [vmem:[%s3 + $0x110] sm:$0xff]
  %v1846 = vld [vmem:[%s3 + $0x118] sm:$0xff]
  %v1847 = vld [vmem:[%s3 + $0x120] sm:$0xff]
  %v1848 = vld [vmem:[%s3 + $0x128] sm:$0xff]
  %v1849 = vld [vmem:[%s3 + $0x130] sm:$0xff]
  %v1850 = vld [vmem:[%s3 + $0x138] sm:$0xff]
  %v1851 = vld [vmem:[%s3 + $0x140] sm:$0xff]
  %v1852 = vld [vmem:[%s3 + $0x148] sm:$0xff]
  %v1853 = vld [vmem:[%s3 + $0x150] sm:$0xff]
  %v1854 = vld [vmem:[%s3 + $0x158] sm:$0xff]
  %v1855 = vld [vmem:[%s3 + $0x160] sm:$0xff]
  %v1856 = vld [vmem:[%s3 + $0x168] sm:$0xff]
  %v1857 = vld [vmem:[%s3 + $0x170] sm:$0xff]
  %v1858 = vld [vmem:[%s3 + $0x178] sm:$0xff]
  %v1859 = vld [vmem:[%s3 + $0x180] sm:$0xff]
  %v1860 = vld [vmem:[%s3 + $0x188] sm:$0xff]
  %v1861 = vld [vmem:[%s3 + $0x190] sm:$0xff]
  %v1862 = vld [vmem:[%s3 + $0x198] sm:$0xff]
  %v1863 = vld [vmem:[%s3 + $0x1a0] sm:$0xff]
  %v1864 = vld [vmem:[%s3 + $0x1a8] sm:$0xff]
  %v1865 = vld [vmem:[%s3 + $0x1b0] sm:$0xff]
  %v1866 = vld [vmem:[%s3 + $0x1b8] sm:$0xff]
  %v1867 = vld [vmem:[%s3 + $0x1c0] sm:$0xff]
  %v1868 = vld [vmem:[%s3 + $0x1c8] sm:$0xff]
  %v1869 = vld [vmem:[%s3 + $0x1d0] sm:$0xff]
  %v1870 = vld [vmem:[%s3 + $0x1d8] sm:$0xff]
  %v1871 = vld [vmem:[%s3 + $0x1e0] sm:$0xff]
  %v1872 = vld [vmem:[%s3 + $0x1e8] sm:$0xff]
  %v1873 = vld [vmem:[%s3 + $0x1f0] sm:$0xff]
  %v1874 = vld [vmem:[%s3 + $0x1f8] sm:$0xff]
  %v1875 = vld [vmem:[%s4] sm:$0x3]
  %v1877 = vlaneseq
  %v1878 = vshrl.u32 %v1877, 7
  %v1879 = vsub.s32 0, %v1878
  %v1880 = vrot.slane %v1875, %v1879
  %v1881 = vlaneseq
  %v1882 = vshrl.u32 %v1881, 7
  %v1883 = vsub.s32 1, %v1882
  %v1884 = vrot.slane %v1875, %v1883
  %v1951 = vunpack.c.l.b16 %v1811
  %v1952 = vunpack.c.h.b16 %v1811
  %v1953 = vunpack.c.l.b16 %v1812
  %v1954 = vunpack.c.h.b16 %v1812
  %v1955 = vunpack.c.l.b16 %v1813
  %v1956 = vunpack.c.h.b16 %v1813
  %v1957 = vunpack.c.l.b16 %v1814
  %v1958 = vunpack.c.h.b16 %v1814
  %v1959 = vunpack.c.l.b16 %v1815
  %v1960 = vunpack.c.h.b16 %v1815
  %v1961 = vunpack.c.l.b16 %v1816
  %v1962 = vunpack.c.h.b16 %v1816
  %v1963 = vunpack.c.l.b16 %v1817
  %v1964 = vunpack.c.h.b16 %v1817
  %v1965 = vunpack.c.l.b16 %v1818
  %v1966 = vunpack.c.h.b16 %v1818
  %v1967 = vunpack.c.l.b16 %v1819
  %v1968 = vunpack.c.h.b16 %v1819
  %v1969 = vunpack.c.l.b16 %v1820
  %v1970 = vunpack.c.h.b16 %v1820
  %v1971 = vunpack.c.l.b16 %v1821
  %v1972 = vunpack.c.h.b16 %v1821
  %v1973 = vunpack.c.l.b16 %v1822
  %v1974 = vunpack.c.h.b16 %v1822
  %v1975 = vunpack.c.l.b16 %v1823
  %v1976 = vunpack.c.h.b16 %v1823
  %v1977 = vunpack.c.l.b16 %v1824
  %v1978 = vunpack.c.h.b16 %v1824
  %v1979 = vunpack.c.l.b16 %v1825
  %v1980 = vunpack.c.h.b16 %v1825
  %v1981 = vunpack.c.l.b16 %v1826
  %v1982 = vunpack.c.h.b16 %v1826
  %v1983 = vunpack.c.l.b16 %v1827
  %v1984 = vunpack.c.h.b16 %v1827
  %v1985 = vunpack.c.l.b16 %v1828
  %v1986 = vunpack.c.h.b16 %v1828
  %v1987 = vunpack.c.l.b16 %v1829
  %v1988 = vunpack.c.h.b16 %v1829
  %v1989 = vunpack.c.l.b16 %v1830
  %v1990 = vunpack.c.h.b16 %v1830
  %v1991 = vunpack.c.l.b16 %v1831
  %v1992 = vunpack.c.h.b16 %v1831
  %v1993 = vunpack.c.l.b16 %v1832
  %v1994 = vunpack.c.h.b16 %v1832
  %v1995 = vunpack.c.l.b16 %v1833
  %v1996 = vunpack.c.h.b16 %v1833
  %v1997 = vunpack.c.l.b16 %v1834
  %v1998 = vunpack.c.h.b16 %v1834
  %v1999 = vunpack.c.l.b16 %v1835
  %v2000 = vunpack.c.h.b16 %v1835
  %v2001 = vunpack.c.l.b16 %v1836
  %v2002 = vunpack.c.h.b16 %v1836
  %v2003 = vunpack.c.l.b16 %v1837
  %v2004 = vunpack.c.h.b16 %v1837
  %v2005 = vunpack.c.l.b16 %v1838
  %v2006 = vunpack.c.h.b16 %v1838
  %v2007 = vunpack.c.l.b16 %v1839
  %v2008 = vunpack.c.h.b16 %v1839
  %v2009 = vunpack.c.l.b16 %v1840
  %v2010 = vunpack.c.h.b16 %v1840
  %v2011 = vunpack.c.l.b16 %v1841
  %v2012 = vunpack.c.h.b16 %v1841
  %v2013 = vunpack.c.l.b16 %v1842
  %v2014 = vunpack.c.h.b16 %v1842
  %v2015 = vunpack.c.l.b16 %v1843
  %v2016 = vunpack.c.h.b16 %v1843
  %v2017 = vunpack.c.l.b16 %v1844
  %v2018 = vunpack.c.h.b16 %v1844
  %v2019 = vunpack.c.l.b16 %v1845
  %v2020 = vunpack.c.h.b16 %v1845
  %v2021 = vunpack.c.l.b16 %v1846
  %v2022 = vunpack.c.h.b16 %v1846
  %v2023 = vunpack.c.l.b16 %v1847
  %v2024 = vunpack.c.h.b16 %v1847
  %v2025 = vunpack.c.l.b16 %v1848
  %v2026 = vunpack.c.h.b16 %v1848
  %v2027 = vunpack.c.l.b16 %v1849
  %v2028 = vunpack.c.h.b16 %v1849
  %v2029 = vunpack.c.l.b16 %v1850
  %v2030 = vunpack.c.h.b16 %v1850
  %v2031 = vunpack.c.l.b16 %v1851
  %v2032 = vunpack.c.h.b16 %v1851
  %v2033 = vunpack.c.l.b16 %v1852
  %v2034 = vunpack.c.h.b16 %v1852
  %v2035 = vunpack.c.l.b16 %v1853
  %v2036 = vunpack.c.h.b16 %v1853
  %v2037 = vunpack.c.l.b16 %v1854
  %v2038 = vunpack.c.h.b16 %v1854
  %v2039 = vunpack.c.l.b16 %v1855
  %v2040 = vunpack.c.h.b16 %v1855
  %v2041 = vunpack.c.l.b16 %v1856
  %v2042 = vunpack.c.h.b16 %v1856
  %v2043 = vunpack.c.l.b16 %v1857
  %v2044 = vunpack.c.h.b16 %v1857
  %v2045 = vunpack.c.l.b16 %v1858
  %v2046 = vunpack.c.h.b16 %v1858
  %v2047 = vunpack.c.l.b16 %v1859
  %v2048 = vunpack.c.h.b16 %v1859
  %v2049 = vunpack.c.l.b16 %v1860
  %v2050 = vunpack.c.h.b16 %v1860
  %v2051 = vunpack.c.l.b16 %v1861
  %v2052 = vunpack.c.h.b16 %v1861
  %v2053 = vunpack.c.l.b16 %v1862
  %v2054 = vunpack.c.h.b16 %v1862
  %v2055 = vunpack.c.l.b16 %v1863
  %v2056 = vunpack.c.h.b16 %v1863
  %v2057 = vunpack.c.l.b16 %v1864
  %v2058 = vunpack.c.h.b16 %v1864
  %v2059 = vunpack.c.l.b16 %v1865
  %v2060 = vunpack.c.h.b16 %v1865
  %v2061 = vunpack.c.l.b16 %v1866
  %v2062 = vunpack.c.h.b16 %v1866
  %v2063 = vunpack.c.l.b16 %v1867
  %v2064 = vunpack.c.h.b16 %v1867
  %v2065 = vunpack.c.l.b16 %v1868
  %v2066 = vunpack.c.h.b16 %v1868
  %v2067 = vunpack.c.l.b16 %v1869
  %v2068 = vunpack.c.h.b16 %v1869
  %v2069 = vunpack.c.l.b16 %v1870
  %v2070 = vunpack.c.h.b16 %v1870
  %v2071 = vunpack.c.l.b16 %v1871
  %v2072 = vunpack.c.h.b16 %v1871
  %v2073 = vunpack.c.l.b16 %v1872
  %v2074 = vunpack.c.h.b16 %v1872
  %v2075 = vunpack.c.l.b16 %v1873
  %v2076 = vunpack.c.h.b16 %v1873
  %v2077 = vunpack.c.l.b16 %v1874
  %v2078 = vunpack.c.h.b16 %v1874
  %v2079 = vpack.c.b16 %v1953, %v1951
  %v2080 = vpack.c.b16 %v1954, %v1952
  %v2081 = vpack.c.b16 %v1957, %v1955
  %v2082 = vpack.c.b16 %v1958, %v1956
  %v2083 = vpack.c.b16 %v1961, %v1959
  %v2084 = vpack.c.b16 %v1962, %v1960
  %v2085 = vpack.c.b16 %v1965, %v1963
  %v2086 = vpack.c.b16 %v1966, %v1964
  %v2087 = vpack.c.b16 %v1969, %v1967
  %v2088 = vpack.c.b16 %v1970, %v1968
  %v2089 = vpack.c.b16 %v1973, %v1971
  %v2090 = vpack.c.b16 %v1974, %v1972
  %v2091 = vpack.c.b16 %v1977, %v1975
  %v2092 = vpack.c.b16 %v1978, %v1976
  %v2093 = vpack.c.b16 %v1981, %v1979
  %v2094 = vpack.c.b16 %v1982, %v1980
  %v2095 = vpack.c.b16 %v1985, %v1983
  %v2096 = vpack.c.b16 %v1986, %v1984
  %v2097 = vpack.c.b16 %v1989, %v1987
  %v2098 = vpack.c.b16 %v1990, %v1988
  %v2099 = vpack.c.b16 %v1993, %v1991
  %v2100 = vpack.c.b16 %v1994, %v1992
  %v2101 = vpack.c.b16 %v1997, %v1995
  %v2102 = vpack.c.b16 %v1998, %v1996
  %v2103 = vpack.c.b16 %v2001, %v1999
  %v2104 = vpack.c.b16 %v2002, %v2000
  %v2105 = vpack.c.b16 %v2005, %v2003
  %v2106 = vpack.c.b16 %v2006, %v2004
  %v2107 = vpack.c.b16 %v2009, %v2007
  %v2108 = vpack.c.b16 %v2010, %v2008
  %v2109 = vpack.c.b16 %v2013, %v2011
  %v2110 = vpack.c.b16 %v2014, %v2012
  %v2111 = vpack.c.b16 %v2017, %v2015
  %v2112 = vpack.c.b16 %v2018, %v2016
  %v2113 = vpack.c.b16 %v2021, %v2019
  %v2114 = vpack.c.b16 %v2022, %v2020
  %v2115 = vpack.c.b16 %v2025, %v2023
  %v2116 = vpack.c.b16 %v2026, %v2024
  %v2117 = vpack.c.b16 %v2029, %v2027
  %v2118 = vpack.c.b16 %v2030, %v2028
  %v2119 = vpack.c.b16 %v2033, %v2031
  %v2120 = vpack.c.b16 %v2034, %v2032
  %v2121 = vpack.c.b16 %v2037, %v2035
  %v2122 = vpack.c.b16 %v2038, %v2036
  %v2123 = vpack.c.b16 %v2041, %v2039
  %v2124 = vpack.c.b16 %v2042, %v2040
  %v2125 = vpack.c.b16 %v2045, %v2043
  %v2126 = vpack.c.b16 %v2046, %v2044
  %v2127 = vpack.c.b16 %v2049, %v2047
  %v2128 = vpack.c.b16 %v2050, %v2048
  %v2129 = vpack.c.b16 %v2053, %v2051
  %v2130 = vpack.c.b16 %v2054, %v2052
  %v2131 = vpack.c.b16 %v2057, %v2055
  %v2132 = vpack.c.b16 %v2058, %v2056
  %v2133 = vpack.c.b16 %v2061, %v2059
  %v2134 = vpack.c.b16 %v2062, %v2060
  %v2135 = vpack.c.b16 %v2065, %v2063
  %v2136 = vpack.c.b16 %v2066, %v2064
  %v2137 = vpack.c.b16 %v2069, %v2067
  %v2138 = vpack.c.b16 %v2070, %v2068
  %v2139 = vpack.c.b16 %v2073, %v2071
  %v2140 = vpack.c.b16 %v2074, %v2072
  %v2141 = vpack.c.b16 %v2077, %v2075
  %v2142 = vpack.c.b16 %v2078, %v2076
  %2207 = vmatprep.subr.bf16.mxu0 %v2094
  %2208 = vmatpush1.bf16.msra.mxu0 %v2093
  %2209 = vmatprep.subr.bf16.mxu0 %v2092
  %2210 = vmatpush1.bf16.msra.mxu0 %v2091
  %2211 = vmatprep.subr.bf16.mxu0 %v2090
  %2212 = vmatpush1.bf16.msra.mxu0 %v2089
  %2213 = vmatprep.subr.bf16.mxu0 %v2088
  %2214 = vmatpush1.bf16.msra.mxu0 %v2087
  %2215 = vmatprep.subr.bf16.mxu0 %v2086
  %2216 = vmatpush1.bf16.msra.mxu0 %v2085
  %2217 = vmatprep.subr.bf16.mxu0 %v2084
  %2218 = vmatpush1.bf16.msra.mxu0 %v2083
  %2219 = vmatprep.subr.bf16.mxu0 %v2082
  %2220 = vmatpush1.bf16.msra.mxu0 %v2081
  %2221 = vmatprep.subr.bf16.mxu0 %v2080
  %2222 = vmatpush1.bf16.msra.mxu0 %v2079
  %2223 = vmatprep.subr.bf16.mxu0 %v2110
  %2224 = vmatpush2.bf16.msra.mxu0 %v2109
  %2225 = vmatprep.subr.bf16.mxu0 %v2108
  %2226 = vmatpush2.bf16.msra.mxu0 %v2107
  %2227 = vmatprep.subr.bf16.mxu0 %v2106
  %2228 = vmatpush2.bf16.msra.mxu0 %v2105
  %2229 = vmatprep.subr.bf16.mxu0 %v2104
  %2230 = vmatpush2.bf16.msra.mxu0 %v2103
  %2231 = vmatprep.subr.bf16.mxu0 %v2102
  %2232 = vmatpush2.bf16.msra.mxu0 %v2101
  %2233 = vmatprep.subr.bf16.mxu0 %v2100
  %2234 = vmatpush2.bf16.msra.mxu0 %v2099
  %2235 = vmatprep.subr.bf16.mxu0 %v2098
  %2236 = vmatpush2.bf16.msra.mxu0 %v2097
  %2237 = vmatprep.subr.bf16.mxu0 %v2096
  %2238 = vmatpush2.bf16.msra.mxu0 %v2095
  %2239 = vmatprep.mubr.bf16.mxu0 %v1808
  %2240 = vmatmul.mubr.bf16.gmra.mxu0 %v1807
  %v2241 = vpop.f32.mrf.mxu0
  %v2242 = vadd.f32 %v1880, %v2241
  %v2243 = vpop.f32.mrf.mxu0
  %v2244 = vadd.f32 %v1884, %v2243
  %v2245 = vpop.f32.mrf.mxu0
  %v2246 = vadd.f32 %v1880, %v2245
  %v2247 = vpop.f32.mrf.mxu0
  %v2248 = vadd.f32 %v1884, %v2247
  %2249 = vdwg.mxu0
  %2250 = vmatprep.subr.bf16.mxu0 %v2126
  %2251 = vmatpush1.bf16.msra.mxu0 %v2125
  %2252 = vmatprep.subr.bf16.mxu0 %v2124
  %2253 = vmatpush1.bf16.msra.mxu0 %v2123
  %2254 = vmatprep.subr.bf16.mxu0 %v2122
  %2255 = vmatpush1.bf16.msra.mxu0 %v2121
  %2256 = vmatprep.subr.bf16.mxu0 %v2120
  %2257 = vmatpush1.bf16.msra.mxu0 %v2119
  %2258 = vmatprep.subr.bf16.mxu0 %v2118
  %2259 = vmatpush1.bf16.msra.mxu0 %v2117
  %2260 = vmatprep.subr.bf16.mxu0 %v2116
  %2261 = vmatpush1.bf16.msra.mxu0 %v2115
  %2262 = vmatprep.subr.bf16.mxu0 %v2114
  %2263 = vmatpush1.bf16.msra.mxu0 %v2113
  %2264 = vmatprep.subr.bf16.mxu0 %v2112
  %2265 = vmatpush1.bf16.msra.mxu0 %v2111
  %2266 = vmatprep.subr.bf16.mxu0 %v2142
  %2267 = vmatpush2.bf16.msra.mxu0 %v2141
  %2268 = vmatprep.subr.bf16.mxu0 %v2140
  %2269 = vmatpush2.bf16.msra.mxu0 %v2139
  %2270 = vmatprep.subr.bf16.mxu0 %v2138
  %2271 = vmatpush2.bf16.msra.mxu0 %v2137
  %2272 = vmatprep.subr.bf16.mxu0 %v2136
  %2273 = vmatpush2.bf16.msra.mxu0 %v2135
  %2274 = vmatprep.subr.bf16.mxu0 %v2134
  %2275 = vmatpush2.bf16.msra.mxu0 %v2133
  %2276 = vmatprep.subr.bf16.mxu0 %v2132
  %2277 = vmatpush2.bf16.msra.mxu0 %v2131
  %2278 = vmatprep.subr.bf16.mxu0 %v2130
  %2279 = vmatpush2.bf16.msra.mxu0 %v2129
  %2280 = vmatprep.subr.bf16.mxu0 %v2128
  %2281 = vmatpush2.bf16.msra.mxu0 %v2127
  %2282 = vmatprep.mubr.bf16.mxu0 %v1810
  %2283 = vmatmul.mubr.bf16.gmra.mxu0 %v1809
  %v2284 = vpop.f32.mrf.mxu0
  %v2285 = vadd.f32 %v2242, %v2284
  %v2286 = vpop.f32.mrf.mxu0
  %v2287 = vadd.f32 %v2244, %v2286
  %v2288 = vpop.f32.mrf.mxu0
  %v2289 = vadd.f32 %v2246, %v2288
  %v2290 = vpop.f32.mrf.mxu0
  %v2291 = vadd.f32 %v2248, %v2290
  %2292 = vdwg.mxu0
  %vm2293 = vcmp.gt.f32.partialorder %v2285, 0.0
  %vm2294 = vcmp.gt.f32.partialorder %v2287, 0.0
  %vm2295 = vcmp.gt.f32.partialorder %v2289, 0.0
  %vm2296 = vcmp.gt.f32.partialorder %v2291, 0.0
  %v2297 = vmul.f32 %v2285, 0.2
  %v2298 = vmul.f32 %v2287, 0.2
  %v2299 = vmul.f32 %v2289, 0.2
  %v2300 = vmul.f32 %v2291, 0.2
  %v2301 = vsel %vm2293, %v2285, %v2297
  %v2302 = vsel %vm2294, %v2287, %v2298
  %v2303 = vsel %vm2295, %v2289, %v2299
  %v2304 = vsel %vm2296, %v2291, %v2300
  %v2305 = vld [vmem:[%s5] sm:$0x3]
  %v2307 = vlaneseq
  %v2308 = vshrl.u32 %v2307, 7
  %v2309 = vsub.s32 0, %v2308
  %v2310 = vrot.slane %v2305, %v2309
  %v2311 = vlaneseq
  %v2312 = vshrl.u32 %v2311, 7
  %v2313 = vsub.s32 1, %v2312
  %v2314 = vrot.slane %v2305, %v2313
  %v2317 = vmul.f32 %v2301, %v2310
  %v2318 = vmul.f32 %v2302, %v2314
  %v2319 = vmul.f32 %v2303, %v2310
  %v2320 = vmul.f32 %v2304, %v2314
  %v2321 = vadd.f32 %v2317, %v2318
  %2322 = vadd.xlane.f32.xlu0 %v2321
  %v2323 = vpop.xlane.xlu0 %2322
  %v2324 = vadd.f32 %v2319, %v2320
  %2325 = vadd.xlane.f32.xlu0 %v2324
  %v2326 = vpop.xlane.xlu0 %2325
  %v2327 = vld [vmem:[#allocation2] sm:$0x1]
  %v2329 = vlaneseq
  %v2330 = vshrl.u32 %v2329, 7
  %v2331 = vsub.s32 0, %v2330
  %v2332 = vrot.slane %v2327, %v2331
  %v2334 = vadd.f32 %v2323, %v2332
  %v2335 = vadd.f32 %v2326, %v2332
  %v2336 = vsub.f32 0.0, %v2334
  %v2337 = vsub.f32 0.0, %v2335
  %v2338 = vmul.f32 %v2336, 1.442695
  %v2339 = vpow.pop %v2338
  %v2340 = vmul.f32 %v2337, 1.442695
  %v2341 = vpow.pop %v2340
  %v2342 = vadd.f32 %v2339, 1.0
  %v2343 = vadd.f32 %v2341, 1.0
  %v2344 = vrcp.pop %v2342
  %v2345 = vmul.f32 1.0, %v2344
  %v2346 = vrcp.pop %v2343
  %v2347 = vmul.f32 1.0, %v2346
  %vm2348 = vcmask 7168
  %2349 = vst.msk [vmem:[%s7] sm:$0xff] %vm2348, %v2345
  %2350 = vst.msk [vmem:[%s7 + $0x8] sm:$0xff] %vm2348, %v2347
  // Predicated region
  $region30: #{discriminator_forward.1} parent=0 // pred_check
    _
  $region31: #{discriminator_forward.1} parent=0 // pred_check_branch
    %2352 = sbr.rel (0) target = $region33
  $region32: #{discriminator_forward.1} parent=0 // pred_region
    _
  $region33: #{discriminator_forward.1} parent=0 // pred_fallthru
    _
  // Predicated region
  $region34: #{discriminator_forward.1} parent=0 // pred_check
    _
  $region35: #{discriminator_forward.1} parent=0 // pred_check_branch
    %2354 = sbr.rel (0) target = $region37
  $region36: #{discriminator_forward.1} parent=0 // pred_region
    _
  $region37: #{discriminator_forward.1} parent=0 // pred_fallthru
    _

</llo_original>
